<compile_context>
chip_gen: v7x
topology: tpu7x:2x2x1
jax: 0.10.0
libtpu: 0.0.40
codegen_flags: <defaults>
</compile_context>

<pallas_src>
import math
import functools

import jax
import jax.numpy as jnp
from jax.experimental import pallas as pl
from jax.experimental.pallas import tpu as pltpu


# ----------------------------- config -----------------------------
class Config:
    hidden_size = 64
    intermediate_size = 128
    num_attention_heads = 4
    num_key_value_heads = 2
    num_hidden_layers = 2
    num_layers = 2                 # used for scale_depth / sqrt(num_layers)
    rms_norm_eps = 1e-6
    rope_theta = 10000.0
    qk_norm = True
    scale_depth = 1.4
    hidden_act = "silu"


# ----------------------------- kernel A: attention block -----------------------------
def _attn_block_kernel(x_ref, r_ref, lnw_ref, wqkv_ref, qn_ref, kn_ref,
                       cos_ref, sin_ref, wo_ref, o_ref, res_ref, *,
                       eps, nH, nKV, D, scale, depth_scale, qk_norm):
    # x/r/o/res blocks: (1, S, H); weights loaded whole (constant index map -> resident).
    x = x_ref[0].astype(jnp.float32)          # [S, H]
    r = r_ref[0].astype(jnp.float32)          # [S, H]

    # residual add + RMSNorm (layernorm_before_attention)
    resid = x + r
    res_ref[0] = resid.astype(res_ref.dtype)
    var = jnp.mean(resid * resid, axis=-1, keepdims=True)
    h = resid * jax.lax.rsqrt(var + eps) * lnw_ref[...].astype(jnp.float32)   # [S, H]

    # fused QKV projection on the MXU (bf16 operands, f32 accumulate)
    qkv = jnp.dot(h.astype(jnp.bfloat16), wqkv_ref[...],
                  preferred_element_type=jnp.float32)                         # [S, (nH+2nKV)*D]

    cos = cos_ref[...].astype(jnp.float32)    # [S, D] (batch-invariant)
    sin = sin_ref[...].astype(jnp.float32)
    qn = qn_ref[...].astype(jnp.float32)      # [1, D]
    kn = kn_ref[...].astype(jnp.float32)      # [1, D]
    half = D // 2

    def head_norm_rope(xh, w):
        # per-head RMSNorm (optional) followed by NeoX rotate-half RoPE, all 2-D [S, D].
        if qk_norm:
            v = jnp.mean(xh * xh, axis=-1, keepdims=True)
            xh = xh * jax.lax.rsqrt(v + eps) * w
        x1 = xh[:, :half]
        x2 = xh[:, half:]
        rot = jnp.concatenate([-x2, x1], axis=-1)
        return xh * cos + rot * sin

    # K/V prepared ONCE per KV head (implicit GQA: no repeat, no redundant RoPE on K copies)
    rep = nH // nKV
    ks, vs = [], []
    for g in range(nKV):
        k_h = qkv[:, (nH + g) * D:(nH + g + 1) * D]                # [S, D]
        ks.append(head_norm_rope(k_h, kn).astype(jnp.bfloat16))
        vs.append(qkv[:, (nH + nKV + g) * D:(nH + nKV + g + 1) * D].astype(jnp.bfloat16))

    S = x.shape[0]
    qi = jax.lax.broadcasted_iota(jnp.int32, (S, S), 0)
    ki = jax.lax.broadcasted_iota(jnp.int32, (S, S), 1)
    causal = ki <= qi

    outs = []
    for hd in range(nH):
        q_h = head_norm_rope(qkv[:, hd * D:(hd + 1) * D], qn).astype(jnp.bfloat16)   # [S, D]
        g = hd // rep                                            # kv_head = h // rep
        s = jax.lax.dot_general(q_h, ks[g], (((1,), (1,)), ((), ())),
                                preferred_element_type=jnp.float32) * scale          # [S, S]
        s = jnp.where(causal, s, jnp.float32(-1e30))
        s = s - jnp.max(s, axis=-1, keepdims=True)
        p = jnp.exp(s)
        p = p * pl.reciprocal(jnp.sum(p, axis=-1, keepdims=True), approx=True)
        outs.append(jnp.dot(p.astype(jnp.bfloat16), vs[g],
                            preferred_element_type=jnp.float32))                     # [S, D]

    attn = jnp.concatenate(outs, axis=-1)                                            # [S, nH*D]

    # fused output projection + depth_scale, lane-dense [S, H] store
    out = jnp.dot(attn.astype(jnp.bfloat16), wo_ref[...],
                  preferred_element_type=jnp.float32) * depth_scale
    o_ref[0] = out.astype(o_ref.dtype)


def attention_block(x, res, ln_w, w_qkv, q_norm, k_norm, cos, sin, w_o, cfg):
    # x, res: [B, S, H]; cos/sin: [S, D]; returns (attn_out [B,S,H], new_residual [B,S,H])
    B, S, H = x.shape
    nH = cfg.num_attention_heads
    nKV = cfg.num_key_value_heads
    D = H // nH
    Nqkv = (nH + 2 * nKV) * D
    depth_scale = (cfg.scale_depth / math.sqrt(cfg.num_layers)
                   if cfg.scale_depth > 0 else 1.0)

    kern = functools.partial(
        _attn_block_kernel, eps=cfg.rms_norm_eps, nH=nH, nKV=nKV, D=D,
        scale=D ** -0.5, depth_scale=depth_scale, qk_norm=cfg.qk_norm)

    act_spec = pl.BlockSpec((1, S, H), lambda b: (b, 0, 0))
    return pl.pallas_call(
        kern,
        out_shape=(jax.ShapeDtypeStruct((B, S, H), jnp.float32),
                   jax.ShapeDtypeStruct((B, S, H), jnp.float32)),
        grid=(B,),
        in_specs=[act_spec,                                        # x
                  act_spec,                                        # residual in
                  pl.BlockSpec((1, H), lambda b: (0, 0)),          # ln_attn weight
                  pl.BlockSpec((H, Nqkv), lambda b: (0, 0)),       # w_qkv (bf16)
                  pl.BlockSpec((1, D), lambda b: (0, 0)),          # q_norm weight
                  pl.BlockSpec((1, D), lambda b: (0, 0)),          # k_norm weight
                  pl.BlockSpec((S, D), lambda b: (0, 0)),          # cos
                  pl.BlockSpec((S, D), lambda b: (0, 0)),          # sin
                  pl.BlockSpec((nH * D, H), lambda b: (0, 0))],    # w_o (bf16)
        out_specs=(act_spec, act_spec),
        compiler_params=pltpu.CompilerParams(
            dimension_semantics=("parallel",)),
    )(x, res, ln_w, w_qkv, q_norm, k_norm, cos, sin, w_o)


# ----------------------------- kernel B: FFN block -----------------------------
def _ffn_block_kernel(x_ref, r_ref, lnw_ref, wgu_ref, wdn_ref, o_ref, res_ref, *,
                      eps, I, depth_scale):
    resid = x_ref[...].astype(jnp.float32) + r_ref[...].astype(jnp.float32)   # [tm, H]
    res_ref[...] = resid.astype(res_ref.dtype)
    var = jnp.mean(resid * resid, axis=-1, keepdims=True)
    h = resid * jax.lax.rsqrt(var + eps) * lnw_ref[...].astype(jnp.float32)

    gu = jnp.dot(h.astype(jnp.bfloat16), wgu_ref[...],
                 preferred_element_type=jnp.float32)                          # [tm, 2I]
    gate = gu[:, :I]
    up = gu[:, I:]
    act = gate * jax.nn.sigmoid(gate) * up                                    # SiluAndMul

    out = jnp.dot(act.astype(jnp.bfloat16), wdn_ref[...],
                  preferred_element_type=jnp.float32) * depth_scale
    o_ref[...] = out.astype(o_ref.dtype)


def _token_tile(M, max_tile=256):
    # largest power-of-two tile (<= max_tile, multiple of 8) that still yields >= 2 grid
    # steps (megacore), else the whole M in one block.
    best = M
    for tm in (8, 16, 32, 64, 128, 256):
        if tm <= max_tile and M % tm == 0 and M // tm >= 2:
            best = tm
    return best


def ffn_block(x, res, ln_w, w_gate_up, w_down, cfg):
    # x, res: [M, H]; returns (ffn_out [M,H], new_residual [M,H])
    M, H = x.shape
    I = cfg.intermediate_size
    depth_scale = (cfg.scale_depth / math.sqrt(cfg.num_layers)
                   if cfg.scale_depth > 0 else 1.0)
    tm = _token_tile(M)

    kern = functools.partial(_ffn_block_kernel, eps=cfg.rms_norm_eps, I=I,
                             depth_scale=depth_scale)
    tok_spec = pl.BlockSpec((tm, H), lambda i: (i, 0))
    return pl.pallas_call(
        kern,
        out_shape=(jax.ShapeDtypeStruct((M, H), jnp.float32),
                   jax.ShapeDtypeStruct((M, H), jnp.float32)),
        grid=(M // tm,),
        in_specs=[tok_spec,                                        # x
                  tok_spec,                                        # residual in
                  pl.BlockSpec((1, H), lambda i: (0, 0)),          # ln_ffn weight
                  pl.BlockSpec((H, 2 * I), lambda i: (0, 0)),      # w_gate_up (bf16)
                  pl.BlockSpec((I, H), lambda i: (0, 0))],         # w_out (bf16)
        out_specs=(tok_spec, tok_spec),
        compiler_params=pltpu.CompilerParams(
            dimension_semantics=("parallel",)),
    )(x, res, ln_w, w_gate_up, w_down)


# ----------------------------- decoder layer glue -----------------------------
def rope_tables(positions, D, theta):
    # batch-invariant cos/sin tables [S, D]
    inv_freq = 1.0 / (theta ** (jnp.arange(0, D, 2, dtype=jnp.float32) / D))
    freqs = positions.astype(jnp.float32)[:, None] * inv_freq[None, :]        # [S, D/2]
    emb = jnp.concatenate([freqs, freqs], axis=-1)                            # [S, D]
    return jnp.cos(emb), jnp.sin(emb)


def cpm_decoder_layer(layer, positions, hidden_states, residual, cfg):
    """Mirrors CPMDecoderLayer.forward: returns (hidden_states, residual)."""
    B, S, H = hidden_states.shape
    D = H // cfg.num_attention_heads
    cos, sin = rope_tables(positions, D, cfg.rope_theta)

    # residual is None  <=>  residual := hidden_states, norm(hidden_states)
    #                        == (hidden_states + 0) path below.
    res_in = jnp.zeros_like(hidden_states) if residual is None else residual

    # ----- attention block (1 fused pallas_call) -----
    attn_o, residual = attention_block(
        hidden_states, res_in, layer["ln_attn"], layer["w_qkv"],
        layer["q_norm"], layer["k_norm"], cos, sin, layer["w_o"], cfg)

    # ----- FFN block (1 fused pallas_call) -----
    ffn_o, res2 = ffn_block(
        attn_o.reshape(B * S, H), residual.reshape(B * S, H),
        layer["ln_ffn"], layer["w_gate_up"], layer["w_out"], cfg)

    return ffn_o.reshape(B, S, H), res2.reshape(B, S, H)


def init_params(key, cfg):
    H = cfg.hidden_size
    nH = cfg.num_attention_heads
    nKV = cfg.num_key_value_heads
    D = H // nH
    I = cfg.intermediate_size
    layers = []
    for lk in jax.random.split(key, cfg.num_hidden_layers):
        k1, k2, k3, k4 = jax.random.split(lk, 4)
        layers.append(dict(
            ln_attn=jnp.ones((1, H), jnp.float32),
            ln_ffn=jnp.ones((1, H), jnp.float32),
            q_norm=jnp.ones((1, D), jnp.float32),
            k_norm=jnp.ones((1, D), jnp.float32),
            # projection weights stored in bf16 (MXU-native)
            w_qkv=(0.02 * jax.random.normal(k1, (H, (nH + 2 * nKV) * D),
                                            jnp.float32)).astype(jnp.bfloat16),
            w_o=(0.02 * jax.random.normal(k2, (nH * D, H),
                                          jnp.float32)).astype(jnp.bfloat16),
            w_gate_up=(0.02 * jax.random.normal(k3, (H, 2 * I),
                                                jnp.float32)).astype(jnp.bfloat16),
            w_out=(0.02 * jax.random.normal(k4, (I, H),
                                            jnp.float32)).astype(jnp.bfloat16),
        ))
    return dict(layers=layers)


# ----------------------------- main -----------------------------
if __name__ == "__main__":
    cfg = Config()
    B, S, H = 2, 8, cfg.hidden_size

    key = jax.random.PRNGKey(0)
    k_x, k_p = jax.random.split(key)
    hidden_states = jax.random.normal(k_x, (B, S, H), dtype=jnp.float32)
    positions = jnp.arange(S, dtype=jnp.int32)          # prefill positions (batch-invariant)
    params = init_params(k_p, cfg)

    x, residual = hidden_states, None
    for layer in params["layers"]:                       # stack of CPMDecoderLayer
        x, residual = cpm_decoder_layer(layer, positions, x, residual, cfg)

    x, residual = jax.block_until_ready((x, residual))
    assert x.shape == (B, S, H) and residual.shape == (B, S, H)
    assert jnp.all(jnp.isfinite(x)) and jnp.all(jnp.isfinite(residual))
    print("KERNEL_OK")
</pallas_src>

<mosaic_0001>
module attributes {stable_mosaic.version = 11 : i64} {
  func.func @_attn_block_kernel(%arg0: i32, %arg1: memref<1x8x64xf32, #tpu.memory_space<vmem>>, %arg2: memref<1x8x64xf32, #tpu.memory_space<vmem>>, %arg3: memref<1x64xf32, #tpu.memory_space<vmem>>, %arg4: memref<64x128xbf16, #tpu.memory_space<vmem>>, %arg5: memref<1x16xf32, #tpu.memory_space<vmem>>, %arg6: memref<1x16xf32, #tpu.memory_space<vmem>>, %arg7: memref<8x16xf32, #tpu.memory_space<vmem>>, %arg8: memref<8x16xf32, #tpu.memory_space<vmem>>, %arg9: memref<64x64xbf16, #tpu.memory_space<vmem>>, %arg10: memref<1x8x64xf32, #tpu.memory_space<vmem>>, %arg11: memref<1x8x64xf32, #tpu.memory_space<vmem>>) attributes {dimension_semantics = [#tpu.dimension_semantics<parallel>], iteration_bounds = array<i64: 2>, scalar_prefetch = 0 : i64, scratch_operands = 0 : i64, tpu.core_type = #tpu.core_type<tc>, window_params = [{transform_indices = @transform_0, window_bounds = array<i64: 1, 8, 64>}, {transform_indices = @transform_1, window_bounds = array<i64: 1, 8, 64>}, {pipeline_mode = #tpu.pipeline_mode<synchronous>, transform_indices = @transform_2, window_bounds = array<i64: 1, 64>}, {pipeline_mode = #tpu.pipeline_mode<synchronous>, transform_indices = @transform_3, window_bounds = array<i64: 64, 128>}, {pipeline_mode = #tpu.pipeline_mode<synchronous>, transform_indices = @transform_4, window_bounds = array<i64: 1, 16>}, {pipeline_mode = #tpu.pipeline_mode<synchronous>, transform_indices = @transform_5, window_bounds = array<i64: 1, 16>}, {pipeline_mode = #tpu.pipeline_mode<synchronous>, transform_indices = @transform_6, window_bounds = array<i64: 8, 16>}, {pipeline_mode = #tpu.pipeline_mode<synchronous>, transform_indices = @transform_7, window_bounds = array<i64: 8, 16>}, {pipeline_mode = #tpu.pipeline_mode<synchronous>, transform_indices = @transform_8, window_bounds = array<i64: 64, 64>}, {transform_indices = @transform_9, window_bounds = array<i64: 1, 8, 64>}, {transform_indices = @transform_10, window_bounds = array<i64: 1, 8, 64>}]} {
    %c0 = arith.constant 0 : index
    %c0_0 = arith.constant 0 : index
    %c0_1 = arith.constant 0 : index
    %0 = vector.load %arg1[%c0, %c0_0, %c0_1] : memref<1x8x64xf32, #tpu.memory_space<vmem>>, vector<1x8x64xf32>
    %1 = vector.shape_cast %0 : vector<1x8x64xf32> to vector<8x64xf32>
    %c0_2 = arith.constant 0 : index
    %c0_3 = arith.constant 0 : index
    %c0_4 = arith.constant 0 : index
    %2 = vector.load %arg2[%c0_2, %c0_3, %c0_4] : memref<1x8x64xf32, #tpu.memory_space<vmem>>, vector<1x8x64xf32>
    %3 = vector.shape_cast %2 : vector<1x8x64xf32> to vector<8x64xf32>
    %4 = arith.addf %1, %3 : vector<8x64xf32>
    %c0_5 = arith.constant 0 : index
    %c0_6 = arith.constant 0 : index
    %c0_7 = arith.constant 0 : index
    %5 = vector.load %arg11[%c0_5, %c0_6, %c0_7] : memref<1x8x64xf32, #tpu.memory_space<vmem>>, vector<1x8x64xf32>
    %6 = vector.shape_cast %5 : vector<1x8x64xf32> to vector<8x64xf32>
    %7 = vector.shape_cast %4 : vector<8x64xf32> to vector<1x8x64xf32>
    tpu.vector_store %arg11[%c0_5, %c0_6, %c0_7], %7 {strides = array<i32>} : memref<1x8x64xf32, #tpu.memory_space<vmem>>, vector<1x8x64xf32>,
    %8 = arith.mulf %4, %4 : vector<8x64xf32>
    %cst = arith.constant dense<0.000000e+00> : vector<8xf32>
    %9 = vector.multi_reduction <add>, %8, %cst [1] : vector<8x64xf32> to vector<8xf32>
    %10 = vector.shape_cast %9 : vector<8xf32> to vector<8x1xf32>
    %cst_8 = arith.constant 6.400000e+01 : f32
    %11 = vector.broadcast %cst_8 : f32 to vector<8x1xf32>
    %12 = arith.divf %10, %11 : vector<8x1xf32>
    %cst_9 = arith.constant 9.99999997E-7 : f32
    %13 = vector.broadcast %cst_9 : f32 to vector<8x1xf32>
    %14 = arith.addf %12, %13 : vector<8x1xf32>
    %15 = math.rsqrt %14 : vector<8x1xf32>
    %16 = vector.broadcast %15 : vector<8x1xf32> to vector<8x64xf32>
    %17 = arith.mulf %4, %16 : vector<8x64xf32>
    %c0_10 = arith.constant 0 : index
    %c0_11 = arith.constant 0 : index
    %18 = vector.load %arg3[%c0_10, %c0_11] : memref<1x64xf32, #tpu.memory_space<vmem>>, vector<1x64xf32>
    %19 = vector.broadcast %18 : vector<1x64xf32> to vector<8x64xf32>
    %20 = arith.mulf %17, %19 : vector<8x64xf32>
    %21 = arith.truncf %20 : vector<8x64xf32> to vector<8x64xbf16>
    %c0_12 = arith.constant 0 : index
    %c0_13 = arith.constant 0 : index
    %22 = vector.load %arg4[%c0_12, %c0_13] : memref<64x128xbf16, #tpu.memory_space<vmem>>, vector<64x128xbf16>
    %cst_14 = arith.constant dense<0.000000e+00> : vector<8x128xf32>
    %23 = tpu.matmul %21, %22, %cst_14 {dimension_numbers = #tpu.dot_dimension_numbers<[1], [0], [0], [1], [0, 0, 1, 1], [], []>} : vector<8x64xbf16>, vector<64x128xbf16>, vector<8x128xf32> -> vector<8x128xf32>
    %c0_15 = arith.constant 0 : index
    %c0_16 = arith.constant 0 : index
    %24 = vector.load %arg7[%c0_15, %c0_16] : memref<8x16xf32, #tpu.memory_space<vmem>>, vector<8x16xf32>
    %c0_17 = arith.constant 0 : index
    %c0_18 = arith.constant 0 : index
    %25 = vector.load %arg8[%c0_17, %c0_18] : memref<8x16xf32, #tpu.memory_space<vmem>>, vector<8x16xf32>
    %c0_19 = arith.constant 0 : index
    %c0_20 = arith.constant 0 : index
    %26 = vector.load %arg5[%c0_19, %c0_20] : memref<1x16xf32, #tpu.memory_space<vmem>>, vector<1x16xf32>
    %c0_21 = arith.constant 0 : index
    %c0_22 = arith.constant 0 : index
    %27 = vector.load %arg6[%c0_21, %c0_22] : memref<1x16xf32, #tpu.memory_space<vmem>>, vector<1x16xf32>
    %28 = vector.extract_strided_slice %23 {offsets = [0, 64], sizes = [8, 16], strides = [1, 1]} : vector<8x128xf32> to vector<8x16xf32>
    %29 = arith.mulf %28, %28 : vector<8x16xf32>
    %cst_23 = arith.constant dense<0.000000e+00> : vector<8xf32>
    %30 = vector.multi_reduction <add>, %29, %cst_23 [1] : vector<8x16xf32> to vector<8xf32>
    %31 = vector.shape_cast %30 : vector<8xf32> to vector<8x1xf32>
    %cst_24 = arith.constant 1.600000e+01 : f32
    %32 = vector.broadcast %cst_24 : f32 to vector<8x1xf32>
    %33 = arith.divf %31, %32 : vector<8x1xf32>
    %cst_25 = arith.constant 9.99999997E-7 : f32
    %34 = vector.broadcast %cst_25 : f32 to vector<8x1xf32>
    %35 = arith.addf %33, %34 : vector<8x1xf32>
    %36 = math.rsqrt %35 : vector<8x1xf32>
    %37 = vector.broadcast %36 : vector<8x1xf32> to vector<8x16xf32>
    %38 = arith.mulf %28, %37 : vector<8x16xf32>
    %39 = vector.broadcast %27 : vector<1x16xf32> to vector<8x16xf32>
    %40 = arith.mulf %38, %39 : vector<8x16xf32>
    %41 = vector.extract_strided_slice %40 {offsets = [0, 0], sizes = [8, 8], strides = [1, 1]} : vector<8x16xf32> to vector<8x8xf32>
    %42 = vector.extract_strided_slice %40 {offsets = [0, 8], sizes = [8, 8], strides = [1, 1]} : vector<8x16xf32> to vector<8x8xf32>
    %cst_26 = arith.constant 0.000000e+00 : f32
    %43 = vector.broadcast %cst_26 : f32 to vector<8x8xf32>
    %44 = arith.subf %43, %42 : vector<8x8xf32>
    %45 = tpu.concatenate %44, %41 in 1 : vector<8x8xf32>, vector<8x8xf32> -> vector<8x16xf32>
    %46 = arith.mulf %40, %24 : vector<8x16xf32>
    %47 = arith.mulf %45, %25 : vector<8x16xf32>
    %48 = arith.addf %46, %47 : vector<8x16xf32>
    %49 = arith.truncf %48 : vector<8x16xf32> to vector<8x16xbf16>
    %50 = vector.extract_strided_slice %23 {offsets = [0, 96], sizes = [8, 16], strides = [1, 1]} : vector<8x128xf32> to vector<8x16xf32>
    %51 = arith.truncf %50 : vector<8x16xf32> to vector<8x16xbf16>
    %52 = vector.extract_strided_slice %23 {offsets = [0, 80], sizes = [8, 16], strides = [1, 1]} : vector<8x128xf32> to vector<8x16xf32>
    %53 = arith.mulf %52, %52 : vector<8x16xf32>
    %cst_27 = arith.constant dense<0.000000e+00> : vector<8xf32>
    %54 = vector.multi_reduction <add>, %53, %cst_27 [1] : vector<8x16xf32> to vector<8xf32>
    %55 = vector.shape_cast %54 : vector<8xf32> to vector<8x1xf32>
    %cst_28 = arith.constant 1.600000e+01 : f32
    %56 = vector.broadcast %cst_28 : f32 to vector<8x1xf32>
    %57 = arith.divf %55, %56 : vector<8x1xf32>
    %cst_29 = arith.constant 9.99999997E-7 : f32
    %58 = vector.broadcast %cst_29 : f32 to vector<8x1xf32>
    %59 = arith.addf %57, %58 : vector<8x1xf32>
    %60 = math.rsqrt %59 : vector<8x1xf32>
    %61 = vector.broadcast %60 : vector<8x1xf32> to vector<8x16xf32>
    %62 = arith.mulf %52, %61 : vector<8x16xf32>
    %63 = vector.broadcast %27 : vector<1x16xf32> to vector<8x16xf32>
    %64 = arith.mulf %62, %63 : vector<8x16xf32>
    %65 = vector.extract_strided_slice %64 {offsets = [0, 0], sizes = [8, 8], strides = [1, 1]} : vector<8x16xf32> to vector<8x8xf32>
    %66 = vector.extract_strided_slice %64 {offsets = [0, 8], sizes = [8, 8], strides = [1, 1]} : vector<8x16xf32> to vector<8x8xf32>
    %cst_30 = arith.constant 0.000000e+00 : f32
    %67 = vector.broadcast %cst_30 : f32 to vector<8x8xf32>
    %68 = arith.subf %67, %66 : vector<8x8xf32>
    %69 = tpu.concatenate %68, %65 in 1 : vector<8x8xf32>, vector<8x8xf32> -> vector<8x16xf32>
    %70 = arith.mulf %64, %24 : vector<8x16xf32>
    %71 = arith.mulf %69, %25 : vector<8x16xf32>
    %72 = arith.addf %70, %71 : vector<8x16xf32>
    %73 = arith.truncf %72 : vector<8x16xf32> to vector<8x16xbf16>
    %74 = vector.extract_strided_slice %23 {offsets = [0, 112], sizes = [8, 16], strides = [1, 1]} : vector<8x128xf32> to vector<8x16xf32>
    %75 = arith.truncf %74 : vector<8x16xf32> to vector<8x16xbf16>
    %76 = tpu.iota {dimensions = array<i32: 0>} : vector<8x8xi32>
    %77 = tpu.iota {dimensions = array<i32: 1>} : vector<8x8xi32>
    %78 = arith.cmpi sle, %77, %76 : vector<8x8xi32>
    %79 = vector.extract_strided_slice %23 {offsets = [0, 0], sizes = [8, 16], strides = [1, 1]} : vector<8x128xf32> to vector<8x16xf32>
    %80 = arith.mulf %79, %79 : vector<8x16xf32>
    %cst_31 = arith.constant dense<0.000000e+00> : vector<8xf32>
    %81 = vector.multi_reduction <add>, %80, %cst_31 [1] : vector<8x16xf32> to vector<8xf32>
    %82 = vector.shape_cast %81 : vector<8xf32> to vector<8x1xf32>
    %cst_32 = arith.constant 1.600000e+01 : f32
    %83 = vector.broadcast %cst_32 : f32 to vector<8x1xf32>
    %84 = arith.divf %82, %83 : vector<8x1xf32>
    %cst_33 = arith.constant 9.99999997E-7 : f32
    %85 = vector.broadcast %cst_33 : f32 to vector<8x1xf32>
    %86 = arith.addf %84, %85 : vector<8x1xf32>
    %87 = math.rsqrt %86 : vector<8x1xf32>
    %88 = vector.broadcast %87 : vector<8x1xf32> to vector<8x16xf32>
    %89 = arith.mulf %79, %88 : vector<8x16xf32>
    %90 = vector.broadcast %26 : vector<1x16xf32> to vector<8x16xf32>
    %91 = arith.mulf %89, %90 : vector<8x16xf32>
    %92 = vector.extract_strided_slice %91 {offsets = [0, 0], sizes = [8, 8], strides = [1, 1]} : vector<8x16xf32> to vector<8x8xf32>
    %93 = vector.extract_strided_slice %91 {offsets = [0, 8], sizes = [8, 8], strides = [1, 1]} : vector<8x16xf32> to vector<8x8xf32>
    %cst_34 = arith.constant 0.000000e+00 : f32
    %94 = vector.broadcast %cst_34 : f32 to vector<8x8xf32>
    %95 = arith.subf %94, %93 : vector<8x8xf32>
    %96 = tpu.concatenate %95, %92 in 1 : vector<8x8xf32>, vector<8x8xf32> -> vector<8x16xf32>
    %97 = arith.mulf %91, %24 : vector<8x16xf32>
    %98 = arith.mulf %96, %25 : vector<8x16xf32>
    %99 = arith.addf %97, %98 : vector<8x16xf32>
    %100 = arith.truncf %99 : vector<8x16xf32> to vector<8x16xbf16>
    %cst_35 = arith.constant dense<0.000000e+00> : vector<8x8xf32>
    %101 = tpu.matmul %100, %49, %cst_35 {dimension_numbers = #tpu.dot_dimension_numbers<[1], [1], [0], [0], [0, 0, 1, 0], [], []>} : vector<8x16xbf16>, vector<8x16xbf16>, vector<8x8xf32> -> vector<8x8xf32>
    %cst_36 = arith.constant 2.500000e-01 : f32
    %102 = vector.broadcast %cst_36 : f32 to vector<8x8xf32>
    %103 = arith.mulf %101, %102 : vector<8x8xf32>
    %cst_37 = arith.constant -1.000000e+30 : f32
    %104 = vector.broadcast %cst_37 : f32 to vector<8x8xf32>
    %105 = arith.select %78, %103, %104 : vector<8x8xi1>, vector<8x8xf32>
    %cst_38 = arith.constant dense<0xFF800000> : vector<8xf32>
    %106 = vector.multi_reduction <maximumf>, %105, %cst_38 [1] : vector<8x8xf32> to vector<8xf32>
    %107 = vector.shape_cast %106 : vector<8xf32> to vector<8x1xf32>
    %108 = vector.broadcast %107 : vector<8x1xf32> to vector<8x8xf32>
    %109 = arith.subf %105, %108 : vector<8x8xf32>
    %110 = math.exp %109 : vector<8x8xf32>
    %cst_39 = arith.constant dense<0.000000e+00> : vector<8xf32>
    %111 = vector.multi_reduction <add>, %110, %cst_39 [1] : vector<8x8xf32> to vector<8xf32>
    %112 = vector.shape_cast %111 : vector<8xf32> to vector<8x1xf32>
    %113 = tpu.reciprocal %112 {approx = true} : vector<8x1xf32> -> vector<8x1xf32>
    %114 = vector.broadcast %113 : vector<8x1xf32> to vector<8x8xf32>
    %115 = arith.mulf %110, %114 : vector<8x8xf32>
    %116 = arith.truncf %115 : vector<8x8xf32> to vector<8x8xbf16>
    %cst_40 = arith.constant dense<0.000000e+00> : vector<8x16xf32>
    %117 = tpu.matmul %116, %51, %cst_40 {dimension_numbers = #tpu.dot_dimension_numbers<[1], [0], [0], [1], [0, 0, 1, 1], [], []>} : vector<8x8xbf16>, vector<8x16xbf16>, vector<8x16xf32> -> vector<8x16xf32>
    %118 = vector.extract_strided_slice %23 {offsets = [0, 16], sizes = [8, 16], strides = [1, 1]} : vector<8x128xf32> to vector<8x16xf32>
    %119 = arith.mulf %118, %118 : vector<8x16xf32>
    %cst_41 = arith.constant dense<0.000000e+00> : vector<8xf32>
    %120 = vector.multi_reduction <add>, %119, %cst_41 [1] : vector<8x16xf32> to vector<8xf32>
    %121 = vector.shape_cast %120 : vector<8xf32> to vector<8x1xf32>
    %cst_42 = arith.constant 1.600000e+01 : f32
    %122 = vector.broadcast %cst_42 : f32 to vector<8x1xf32>
    %123 = arith.divf %121, %122 : vector<8x1xf32>
    %cst_43 = arith.constant 9.99999997E-7 : f32
    %124 = vector.broadcast %cst_43 : f32 to vector<8x1xf32>
    %125 = arith.addf %123, %124 : vector<8x1xf32>
    %126 = math.rsqrt %125 : vector<8x1xf32>
    %127 = vector.broadcast %126 : vector<8x1xf32> to vector<8x16xf32>
    %128 = arith.mulf %118, %127 : vector<8x16xf32>
    %129 = vector.broadcast %26 : vector<1x16xf32> to vector<8x16xf32>
    %130 = arith.mulf %128, %129 : vector<8x16xf32>
    %131 = vector.extract_strided_slice %130 {offsets = [0, 0], sizes = [8, 8], strides = [1, 1]} : vector<8x16xf32> to vector<8x8xf32>
    %132 = vector.extract_strided_slice %130 {offsets = [0, 8], sizes = [8, 8], strides = [1, 1]} : vector<8x16xf32> to vector<8x8xf32>
    %cst_44 = arith.constant 0.000000e+00 : f32
    %133 = vector.broadcast %cst_44 : f32 to vector<8x8xf32>
    %134 = arith.subf %133, %132 : vector<8x8xf32>
    %135 = tpu.concatenate %134, %131 in 1 : vector<8x8xf32>, vector<8x8xf32> -> vector<8x16xf32>
    %136 = arith.mulf %130, %24 : vector<8x16xf32>
    %137 = arith.mulf %135, %25 : vector<8x16xf32>
    %138 = arith.addf %136, %137 : vector<8x16xf32>
    %139 = arith.truncf %138 : vector<8x16xf32> to vector<8x16xbf16>
    %cst_45 = arith.constant dense<0.000000e+00> : vector<8x8xf32>
    %140 = tpu.matmul %139, %49, %cst_45 {dimension_numbers = #tpu.dot_dimension_numbers<[1], [1], [0], [0], [0, 0, 1, 0], [], []>} : vector<8x16xbf16>, vector<8x16xbf16>, vector<8x8xf32> -> vector<8x8xf32>
    %cst_46 = arith.constant 2.500000e-01 : f32
    %141 = vector.broadcast %cst_46 : f32 to vector<8x8xf32>
    %142 = arith.mulf %140, %141 : vector<8x8xf32>
    %cst_47 = arith.constant -1.000000e+30 : f32
    %143 = vector.broadcast %cst_47 : f32 to vector<8x8xf32>
    %144 = arith.select %78, %142, %143 : vector<8x8xi1>, vector<8x8xf32>
    %cst_48 = arith.constant dense<0xFF800000> : vector<8xf32>
    %145 = vector.multi_reduction <maximumf>, %144, %cst_48 [1] : vector<8x8xf32> to vector<8xf32>
    %146 = vector.shape_cast %145 : vector<8xf32> to vector<8x1xf32>
    %147 = vector.broadcast %146 : vector<8x1xf32> to vector<8x8xf32>
    %148 = arith.subf %144, %147 : vector<8x8xf32>
    %149 = math.exp %148 : vector<8x8xf32>
    %cst_49 = arith.constant dense<0.000000e+00> : vector<8xf32>
    %150 = vector.multi_reduction <add>, %149, %cst_49 [1] : vector<8x8xf32> to vector<8xf32>
    %151 = vector.shape_cast %150 : vector<8xf32> to vector<8x1xf32>
    %152 = tpu.reciprocal %151 {approx = true} : vector<8x1xf32> -> vector<8x1xf32>
    %153 = vector.broadcast %152 : vector<8x1xf32> to vector<8x8xf32>
    %154 = arith.mulf %149, %153 : vector<8x8xf32>
    %155 = arith.truncf %154 : vector<8x8xf32> to vector<8x8xbf16>
    %cst_50 = arith.constant dense<0.000000e+00> : vector<8x16xf32>
    %156 = tpu.matmul %155, %51, %cst_50 {dimension_numbers = #tpu.dot_dimension_numbers<[1], [0], [0], [1], [0, 0, 1, 1], [], []>} : vector<8x8xbf16>, vector<8x16xbf16>, vector<8x16xf32> -> vector<8x16xf32>
    %157 = vector.extract_strided_slice %23 {offsets = [0, 32], sizes = [8, 16], strides = [1, 1]} : vector<8x128xf32> to vector<8x16xf32>
    %158 = arith.mulf %157, %157 : vector<8x16xf32>
    %cst_51 = arith.constant dense<0.000000e+00> : vector<8xf32>
    %159 = vector.multi_reduction <add>, %158, %cst_51 [1] : vector<8x16xf32> to vector<8xf32>
    %160 = vector.shape_cast %159 : vector<8xf32> to vector<8x1xf32>
    %cst_52 = arith.constant 1.600000e+01 : f32
    %161 = vector.broadcast %cst_52 : f32 to vector<8x1xf32>
    %162 = arith.divf %160, %161 : vector<8x1xf32>
    %cst_53 = arith.constant 9.99999997E-7 : f32
    %163 = vector.broadcast %cst_53 : f32 to vector<8x1xf32>
    %164 = arith.addf %162, %163 : vector<8x1xf32>
    %165 = math.rsqrt %164 : vector<8x1xf32>
    %166 = vector.broadcast %165 : vector<8x1xf32> to vector<8x16xf32>
    %167 = arith.mulf %157, %166 : vector<8x16xf32>
    %168 = vector.broadcast %26 : vector<1x16xf32> to vector<8x16xf32>
    %169 = arith.mulf %167, %168 : vector<8x16xf32>
    %170 = vector.extract_strided_slice %169 {offsets = [0, 0], sizes = [8, 8], strides = [1, 1]} : vector<8x16xf32> to vector<8x8xf32>
    %171 = vector.extract_strided_slice %169 {offsets = [0, 8], sizes = [8, 8], strides = [1, 1]} : vector<8x16xf32> to vector<8x8xf32>
    %cst_54 = arith.constant 0.000000e+00 : f32
    %172 = vector.broadcast %cst_54 : f32 to vector<8x8xf32>
    %173 = arith.subf %172, %171 : vector<8x8xf32>
    %174 = tpu.concatenate %173, %170 in 1 : vector<8x8xf32>, vector<8x8xf32> -> vector<8x16xf32>
    %175 = arith.mulf %169, %24 : vector<8x16xf32>
    %176 = arith.mulf %174, %25 : vector<8x16xf32>
    %177 = arith.addf %175, %176 : vector<8x16xf32>
    %178 = arith.truncf %177 : vector<8x16xf32> to vector<8x16xbf16>
    %cst_55 = arith.constant dense<0.000000e+00> : vector<8x8xf32>
    %179 = tpu.matmul %178, %73, %cst_55 {dimension_numbers = #tpu.dot_dimension_numbers<[1], [1], [0], [0], [0, 0, 1, 0], [], []>} : vector<8x16xbf16>, vector<8x16xbf16>, vector<8x8xf32> -> vector<8x8xf32>
    %cst_56 = arith.constant 2.500000e-01 : f32
    %180 = vector.broadcast %cst_56 : f32 to vector<8x8xf32>
    %181 = arith.mulf %179, %180 : vector<8x8xf32>
    %cst_57 = arith.constant -1.000000e+30 : f32
    %182 = vector.broadcast %cst_57 : f32 to vector<8x8xf32>
    %183 = arith.select %78, %181, %182 : vector<8x8xi1>, vector<8x8xf32>
    %cst_58 = arith.constant dense<0xFF800000> : vector<8xf32>
    %184 = vector.multi_reduction <maximumf>, %183, %cst_58 [1] : vector<8x8xf32> to vector<8xf32>
    %185 = vector.shape_cast %184 : vector<8xf32> to vector<8x1xf32>
    %186 = vector.broadcast %185 : vector<8x1xf32> to vector<8x8xf32>
    %187 = arith.subf %183, %186 : vector<8x8xf32>
    %188 = math.exp %187 : vector<8x8xf32>
    %cst_59 = arith.constant dense<0.000000e+00> : vector<8xf32>
    %189 = vector.multi_reduction <add>, %188, %cst_59 [1] : vector<8x8xf32> to vector<8xf32>
    %190 = vector.shape_cast %189 : vector<8xf32> to vector<8x1xf32>
    %191 = tpu.reciprocal %190 {approx = true} : vector<8x1xf32> -> vector<8x1xf32>
    %192 = vector.broadcast %191 : vector<8x1xf32> to vector<8x8xf32>
    %193 = arith.mulf %188, %192 : vector<8x8xf32>
    %194 = arith.truncf %193 : vector<8x8xf32> to vector<8x8xbf16>
    %cst_60 = arith.constant dense<0.000000e+00> : vector<8x16xf32>
    %195 = tpu.matmul %194, %75, %cst_60 {dimension_numbers = #tpu.dot_dimension_numbers<[1], [0], [0], [1], [0, 0, 1, 1], [], []>} : vector<8x8xbf16>, vector<8x16xbf16>, vector<8x16xf32> -> vector<8x16xf32>
    %196 = vector.extract_strided_slice %23 {offsets = [0, 48], sizes = [8, 16], strides = [1, 1]} : vector<8x128xf32> to vector<8x16xf32>
    %197 = arith.mulf %196, %196 : vector<8x16xf32>
    %cst_61 = arith.constant dense<0.000000e+00> : vector<8xf32>
    %198 = vector.multi_reduction <add>, %197, %cst_61 [1] : vector<8x16xf32> to vector<8xf32>
    %199 = vector.shape_cast %198 : vector<8xf32> to vector<8x1xf32>
    %cst_62 = arith.constant 1.600000e+01 : f32
    %200 = vector.broadcast %cst_62 : f32 to vector<8x1xf32>
    %201 = arith.divf %199, %200 : vector<8x1xf32>
    %cst_63 = arith.constant 9.99999997E-7 : f32
    %202 = vector.broadcast %cst_63 : f32 to vector<8x1xf32>
    %203 = arith.addf %201, %202 : vector<8x1xf32>
    %204 = math.rsqrt %203 : vector<8x1xf32>
    %205 = vector.broadcast %204 : vector<8x1xf32> to vector<8x16xf32>
    %206 = arith.mulf %196, %205 : vector<8x16xf32>
    %207 = vector.broadcast %26 : vector<1x16xf32> to vector<8x16xf32>
    %208 = arith.mulf %206, %207 : vector<8x16xf32>
    %209 = vector.extract_strided_slice %208 {offsets = [0, 0], sizes = [8, 8], strides = [1, 1]} : vector<8x16xf32> to vector<8x8xf32>
    %210 = vector.extract_strided_slice %208 {offsets = [0, 8], sizes = [8, 8], strides = [1, 1]} : vector<8x16xf32> to vector<8x8xf32>
    %cst_64 = arith.constant 0.000000e+00 : f32
    %211 = vector.broadcast %cst_64 : f32 to vector<8x8xf32>
    %212 = arith.subf %211, %210 : vector<8x8xf32>
    %213 = tpu.concatenate %212, %209 in 1 : vector<8x8xf32>, vector<8x8xf32> -> vector<8x16xf32>
    %214 = arith.mulf %208, %24 : vector<8x16xf32>
    %215 = arith.mulf %213, %25 : vector<8x16xf32>
    %216 = arith.addf %214, %215 : vector<8x16xf32>
    %217 = arith.truncf %216 : vector<8x16xf32> to vector<8x16xbf16>
    %cst_65 = arith.constant dense<0.000000e+00> : vector<8x8xf32>
    %218 = tpu.matmul %217, %73, %cst_65 {dimension_numbers = #tpu.dot_dimension_numbers<[1], [1], [0], [0], [0, 0, 1, 0], [], []>} : vector<8x16xbf16>, vector<8x16xbf16>, vector<8x8xf32> -> vector<8x8xf32>
    %cst_66 = arith.constant 2.500000e-01 : f32
    %219 = vector.broadcast %cst_66 : f32 to vector<8x8xf32>
    %220 = arith.mulf %218, %219 : vector<8x8xf32>
    %cst_67 = arith.constant -1.000000e+30 : f32
    %221 = vector.broadcast %cst_67 : f32 to vector<8x8xf32>
    %222 = arith.select %78, %220, %221 : vector<8x8xi1>, vector<8x8xf32>
    %cst_68 = arith.constant dense<0xFF800000> : vector<8xf32>
    %223 = vector.multi_reduction <maximumf>, %222, %cst_68 [1] : vector<8x8xf32> to vector<8xf32>
    %224 = vector.shape_cast %223 : vector<8xf32> to vector<8x1xf32>
    %225 = vector.broadcast %224 : vector<8x1xf32> to vector<8x8xf32>
    %226 = arith.subf %222, %225 : vector<8x8xf32>
    %227 = math.exp %226 : vector<8x8xf32>
    %cst_69 = arith.constant dense<0.000000e+00> : vector<8xf32>
    %228 = vector.multi_reduction <add>, %227, %cst_69 [1] : vector<8x8xf32> to vector<8xf32>
    %229 = vector.shape_cast %228 : vector<8xf32> to vector<8x1xf32>
    %230 = tpu.reciprocal %229 {approx = true} : vector<8x1xf32> -> vector<8x1xf32>
    %231 = vector.broadcast %230 : vector<8x1xf32> to vector<8x8xf32>
    %232 = arith.mulf %227, %231 : vector<8x8xf32>
    %233 = arith.truncf %232 : vector<8x8xf32> to vector<8x8xbf16>
    %cst_70 = arith.constant dense<0.000000e+00> : vector<8x16xf32>
    %234 = tpu.matmul %233, %75, %cst_70 {dimension_numbers = #tpu.dot_dimension_numbers<[1], [0], [0], [1], [0, 0, 1, 1], [], []>} : vector<8x8xbf16>, vector<8x16xbf16>, vector<8x16xf32> -> vector<8x16xf32>
    %235 = tpu.concatenate %117, %156, %195, %234 in 1 : vector<8x16xf32>, vector<8x16xf32>, vector<8x16xf32>, vector<8x16xf32> -> vector<8x64xf32>
    %236 = arith.truncf %235 : vector<8x64xf32> to vector<8x64xbf16>
    %c0_71 = arith.constant 0 : index
    %c0_72 = arith.constant 0 : index
    %237 = vector.load %arg9[%c0_71, %c0_72] : memref<64x64xbf16, #tpu.memory_space<vmem>>, vector<64x64xbf16>
    %cst_73 = arith.constant dense<0.000000e+00> : vector<8x64xf32>
    %238 = tpu.matmul %236, %237, %cst_73 {dimension_numbers = #tpu.dot_dimension_numbers<[1], [0], [0], [1], [0, 0, 1, 1], [], []>} : vector<8x64xbf16>, vector<64x64xbf16>, vector<8x64xf32> -> vector<8x64xf32>
    %cst_74 = arith.constant 0.989949464 : f32
    %239 = vector.broadcast %cst_74 : f32 to vector<8x64xf32>
    %240 = arith.mulf %238, %239 : vector<8x64xf32>
    %c0_75 = arith.constant 0 : index
    %c0_76 = arith.constant 0 : index
    %c0_77 = arith.constant 0 : index
    %241 = vector.load %arg10[%c0_75, %c0_76, %c0_77] : memref<1x8x64xf32, #tpu.memory_space<vmem>>, vector<1x8x64xf32>
    %242 = vector.shape_cast %241 : vector<1x8x64xf32> to vector<8x64xf32>
    %243 = vector.shape_cast %240 : vector<8x64xf32> to vector<1x8x64xf32>
    tpu.vector_store %arg10[%c0_75, %c0_76, %c0_77], %243 {strides = array<i32>} : memref<1x8x64xf32, #tpu.memory_space<vmem>>, vector<1x8x64xf32>,
    return
  }
  func.func @transform_0(%arg0: i32) -> (i32, i32, i32) {
    %c0_i32 = arith.constant 0 : i32
    %c0_i32_0 = arith.constant 0 : i32
    %c0_i32_1 = arith.constant 0 : i32
    return %arg0, %c0_i32, %c0_i32_0 : i32, i32, i32
  }
  func.func @transform_1(%arg0: i32) -> (i32, i32, i32) {
    %c0_i32 = arith.constant 0 : i32
    %c0_i32_0 = arith.constant 0 : i32
    %c0_i32_1 = arith.constant 0 : i32
    return %arg0, %c0_i32, %c0_i32_0 : i32, i32, i32
  }
  func.func @transform_2(%arg0: i32) -> (i32, i32) {
    %c0_i32 = arith.constant 0 : i32
    %c0_i32_0 = arith.constant 0 : i32
    %c0_i32_1 = arith.constant 0 : i32
    return %c0_i32, %c0_i32_0 : i32, i32
  }
  func.func @transform_3(%arg0: i32) -> (i32, i32) {
    %c0_i32 = arith.constant 0 : i32
    %c0_i32_0 = arith.constant 0 : i32
    %c0_i32_1 = arith.constant 0 : i32
    return %c0_i32, %c0_i32_0 : i32, i32
  }
  func.func @transform_4(%arg0: i32) -> (i32, i32) {
    %c0_i32 = arith.constant 0 : i32
    %c0_i32_0 = arith.constant 0 : i32
    %c0_i32_1 = arith.constant 0 : i32
    return %c0_i32, %c0_i32_0 : i32, i32
  }
  func.func @transform_5(%arg0: i32) -> (i32, i32) {
    %c0_i32 = arith.constant 0 : i32
    %c0_i32_0 = arith.constant 0 : i32
    %c0_i32_1 = arith.constant 0 : i32
    return %c0_i32, %c0_i32_0 : i32, i32
  }
  func.func @transform_6(%arg0: i32) -> (i32, i32) {
    %c0_i32 = arith.constant 0 : i32
    %c0_i32_0 = arith.constant 0 : i32
    %c0_i32_1 = arith.constant 0 : i32
    return %c0_i32, %c0_i32_0 : i32, i32
  }
  func.func @transform_7(%arg0: i32) -> (i32, i32) {
    %c0_i32 = arith.constant 0 : i32
    %c0_i32_0 = arith.constant 0 : i32
    %c0_i32_1 = arith.constant 0 : i32
    return %c0_i32, %c0_i32_0 : i32, i32
  }
  func.func @transform_8(%arg0: i32) -> (i32, i32) {
    %c0_i32 = arith.constant 0 : i32
    %c0_i32_0 = arith.constant 0 : i32
    %c0_i32_1 = arith.constant 0 : i32
    return %c0_i32, %c0_i32_0 : i32, i32
  }
  func.func @transform_9(%arg0: i32) -> (i32, i32, i32) {
    %c0_i32 = arith.constant 0 : i32
    %c0_i32_0 = arith.constant 0 : i32
    %c0_i32_1 = arith.constant 0 : i32
    return %arg0, %c0_i32, %c0_i32_0 : i32, i32, i32
  }
  func.func @transform_10(%arg0: i32) -> (i32, i32, i32) {
    %c0_i32 = arith.constant 0 : i32
    %c0_i32_0 = arith.constant 0 : i32
    %c0_i32_1 = arith.constant 0 : i32
    return %arg0, %c0_i32, %c0_i32_0 : i32, i32, i32
  }
}

</mosaic_0001>

<llo_original>
// kernel: tpu_custom_call.1
$region0: #{tpu_custom_call.1}
  #allocation0 [shape = 'u32[]', space=smem, size = 0x4, offset = 0x4, fixed_abs, tag = 'smem constant byte address 0x4 - core index']
  #allocation1 [shape = 'u32[144,128]{1,0:T(1,128)}', space=vmem, size = 0x12000, scoped, tag = 'internal scratch']
  %s0 = inlined_call_operand.hbm [shape: f32[2,8,64], index: 0, kind: input, shape index: {}]
  %s1 = inlined_call_operand.hbm [shape: f32[2,8,64], index: 1, kind: input, shape index: {}]
  %s2 = inlined_call_operand.vmem [shape: f32[1,64], index: 2, kind: input, shape index: {}]
  %s3 = inlined_call_operand.hbm [shape: bf16[64,128], index: 3, kind: input, shape index: {}]
  %s4 = inlined_call_operand.vmem [shape: f32[1,16], index: 4, kind: input, shape index: {}]
  %s5 = inlined_call_operand.hbm [shape: f32[1,16], index: 5, kind: input, shape index: {}]
  %s6 = inlined_call_operand.vmem [shape: f32[8,16], index: 6, kind: input, shape index: {}]
  %s7 = inlined_call_operand.vmem [shape: f32[8,16], index: 7, kind: input, shape index: {}]
  %s8 = inlined_call_operand.hbm [shape: bf16[64,64], index: 8, kind: input, shape index: {}]
  %s9 = inlined_call_operand.hbm [shape: f32[2,8,64], index: 9, kind: output, shape index: {0}]
  %s10 = inlined_call_operand.hbm [shape: f32[2,8,64], index: 10, kind: output, shape index: {1}]
  %11 = xla_tuple %s9, %s10
  %s12 = sld [smem:[#allocation0]]
  $region97: #{tpu_custom_call.1} parent=0
    _
  %s14 = ssub.s32 1, %s12
  %s15 = scalar_select 0, %s14, %s12
  $region1: #{tpu_custom_call.1} parent=0
    #allocation2 [shape = 'u8[8192]{0}', space=vmem, size = 0x2000, scoped, tag = 'input window, operand 0']
    #allocation3 [shape = 's32[2]{0}', space=sflag, size = 0x8, scoped, tag = 'scoped memory for tpu_custom_call.1']
    #allocation4 [shape = 's32[2]{0}', space=sflag, size = 0x8, scoped, tag = 'scoped memory for tpu_custom_call.1']
    #allocation5 [shape = 'u8[8192]{0}', space=vmem, size = 0x2000, scoped, tag = 'input window, operand 1']
    #allocation6 [shape = 's32[2]{0}', space=sflag, size = 0x8, scoped, tag = 'scoped memory for tpu_custom_call.1']
    #allocation7 [shape = 'u8[16384]{0}', space=vmem, size = 0x4000, scoped, tag = 'input window, operand 3, single buffered']
    #allocation8 [shape = 'u8[512]{0}', space=vmem, size = 0x400, scoped, tag = 'input window, operand 5, single buffered']
    #allocation9 [shape = 's32[1]{0}', space=sflag, size = 0x4, scoped, tag = 'scoped memory for tpu_custom_call.1']
    #allocation10 [shape = 'u8[16384]{0}', space=vmem, size = 0x4000, scoped, tag = 'input window, operand 8, single buffered']
    #allocation11 [shape = 'u8[8192]{0}', space=vmem, size = 0x2000, scoped, tag = 'output window, operand 0']
    #allocation12 [shape = 'u8[8192]{0}', space=vmem, size = 0x2000, scoped, tag = 'output window, operand 1']
    #allocation13 [shape = 's32[2]{0}', space=sflag, size = 0x8, scoped, tag = 'scoped memory for tpu_custom_call.1']
    %16 = vsyncpa [#allocation3], 0
    %s17 = scalar_lea.sflag [#allocation3], 1
    %18 = vsyncpa %s17, 0
    %19 = vsyncpa [#allocation6], 0
    %s20 = scalar_lea.sflag [#allocation6], 1
    %21 = vsyncpa %s20, 0
    %22 = vsyncpa [#allocation9], 0
    %23 = vsyncpa [#allocation4], 0
    %s24 = scalar_lea.sflag [#allocation4], 1
    %25 = vsyncpa %s24, 0
    %26 = vsyncpa [#allocation13], 0
    %s27 = scalar_lea.sflag [#allocation13], 1
    %28 = vsyncpa %s27, 0
    loop: start=0, step=1, limit=4
    $region2: #{tpu_custom_call.1} parent=1 // loop_pre_header
      _
    $region3: #{tpu_custom_call.1} parent=1 // loop_header
      %s30 = sphi 0, %s34
      %p31 = scmp.ge.s32.totalorder %s30, 4
      %s40 = sphi 0, %s42
      %s43 = sphi 0, %s40
      %s44 = sphi 0, %s43
      %s60 = sphi 0, %s44
      %s66 = sphi 0, %s68
      %s69 = sphi 0, %s66
      %s70 = sphi 0, %s69
      %s86 = sphi 0, %s70
      %s90 = sphi 0, %s90
      %s92 = sphi 0, %s90
      %s93 = sphi 0, %s92
      %s107 = sphi 0, %s93
      %s111 = sphi 0, %s111
      %s113 = sphi 0, %s111
      %s114 = sphi 0, %s113
      %s128 = sphi 0, %s114
      %s132 = sphi 0, %s132
      %s134 = sphi 0, %s132
      %s135 = sphi 0, %s134
      %s149 = sphi 0, %s135
      %s153 = sphi 0, %s153
      %s155 = sphi 0, %s153
      %s156 = sphi 0, %s155
      %s170 = sphi 0, %s156
      %s174 = sphi 0, %s174
      %s176 = sphi 0, %s174
      %s177 = sphi 0, %s176
      %s191 = sphi 0, %s177
      %s195 = sphi 0, %s195
      %s197 = sphi 0, %s195
      %s198 = sphi 0, %s197
      %s212 = sphi 0, %s198
      %s216 = sphi 0, %s216
      %s218 = sphi 0, %s216
      %s219 = sphi 0, %s218
      %s233 = sphi 0, %s219
      %s239 = sphi 0, %s241
      %s242 = sphi 0, %s239
      %s243 = sphi 0, %s242
      %s259 = sphi 0, %s243
      %s265 = sphi 0, %s267
      %s268 = sphi 0, %s265
      %s269 = sphi 0, %s268
      %s285 = sphi 0, %s269
    $region4: #{tpu_custom_call.1} parent=1 // loop_header_branch
      %33 = sbr.rel (%p31) target = $region8
    $region5: #{tpu_custom_call.1} parent=1 // loop_body
      %s35 = ssub.s32 %s30, 1
      %s36 = ssub.s32 %s30, 2
      %s37 = sadd.s32 %s30, 1
      %s38 = ssub.s32 %s30, %s37
      %p39 = scmp.eq.s32.totalorder %s38, 0
      %s41 = sadd.s32 %s40, 1
      %s42 = scalar_select %p39, %s40, %s41
      %p45 = pneg %p39
      %p46 = scmp.eq.s32.totalorder %s30, 1
      %p47 = por %p45, %p46
      %p48 = scmp.ne.s32.totalorder %s40, %s43
      %p49 = scmp.eq.s32.totalorder %s30, 0
      %p50 = por %p48, %p49
      %p51 = scmp.ne.s32.totalorder %s40, %s43
      %p52 = scmp.eq.s32.totalorder %s35, 1
      %p53 = por %p51, %p52
      %p54 = scmp.ne.s32.totalorder %s43, %s44
      %p55 = scmp.eq.s32.totalorder %s35, 0
      %p56 = por %p54, %p55
      %p57 = scmp.ne.s32.totalorder %s43, %s44
      %p58 = scmp.eq.s32.totalorder %s36, 1
      %p59 = por %p57, %p58
      %p61 = scmp.ne.s32.totalorder %s44, %s60
      %p62 = scmp.eq.s32.totalorder %s36, 0
      %p63 = por %p61, %p62
      %s64 = ssub.s32 %s30, %s37
      %p65 = scmp.eq.s32.totalorder %s64, 0
      %s67 = sadd.s32 %s66, 1
      %s68 = scalar_select %p65, %s66, %s67
      %p71 = pneg %p65
      %p72 = scmp.eq.s32.totalorder %s30, 1
      %p73 = por %p71, %p72
      %p74 = scmp.ne.s32.totalorder %s66, %s69
      %p75 = scmp.eq.s32.totalorder %s30, 0
      %p76 = por %p74, %p75
      %p77 = scmp.ne.s32.totalorder %s66, %s69
      %p78 = scmp.eq.s32.totalorder %s35, 1
      %p79 = por %p77, %p78
      %p80 = scmp.ne.s32.totalorder %s69, %s70
      %p81 = scmp.eq.s32.totalorder %s35, 0
      %p82 = por %p80, %p81
      %p83 = scmp.ne.s32.totalorder %s69, %s70
      %p84 = scmp.eq.s32.totalorder %s36, 1
      %p85 = por %p83, %p84
      %p87 = scmp.ne.s32.totalorder %s70, %s86
      %p88 = scmp.eq.s32.totalorder %s36, 0
      %p89 = por %p87, %p88
      %s91 = sadd.s32 %s90, 1
      %p94 = scmp.eq.s32.totalorder %s30, 1
      %p95 = scmp.ne.s32.totalorder %s90, %s92
      %p96 = scmp.eq.s32.totalorder %s30, 0
      %p97 = por %p95, %p96
      %p98 = scmp.ne.s32.totalorder %s90, %s92
      %p99 = scmp.eq.s32.totalorder %s35, 1
      %p100 = por %p98, %p99
      %p101 = scmp.ne.s32.totalorder %s92, %s93
      %p102 = scmp.eq.s32.totalorder %s35, 0
      %p103 = por %p101, %p102
      %p104 = scmp.ne.s32.totalorder %s92, %s93
      %p105 = scmp.eq.s32.totalorder %s36, 1
      %p106 = por %p104, %p105
      %p108 = scmp.ne.s32.totalorder %s93, %s107
      %p109 = scmp.eq.s32.totalorder %s36, 0
      %p110 = por %p108, %p109
      %s112 = sadd.s32 %s111, 1
      %p115 = scmp.eq.s32.totalorder %s30, 1
      %p116 = scmp.ne.s32.totalorder %s111, %s113
      %p117 = scmp.eq.s32.totalorder %s30, 0
      %p118 = por %p116, %p117
      %p119 = scmp.ne.s32.totalorder %s111, %s113
      %p120 = scmp.eq.s32.totalorder %s35, 1
      %p121 = por %p119, %p120
      %p122 = scmp.ne.s32.totalorder %s113, %s114
      %p123 = scmp.eq.s32.totalorder %s35, 0
      %p124 = por %p122, %p123
      %p125 = scmp.ne.s32.totalorder %s113, %s114
      %p126 = scmp.eq.s32.totalorder %s36, 1
      %p127 = por %p125, %p126
      %p129 = scmp.ne.s32.totalorder %s114, %s128
      %p130 = scmp.eq.s32.totalorder %s36, 0
      %p131 = por %p129, %p130
      %s133 = sadd.s32 %s132, 1
      %p136 = scmp.eq.s32.totalorder %s30, 1
      %p137 = scmp.ne.s32.totalorder %s132, %s134
      %p138 = scmp.eq.s32.totalorder %s30, 0
      %p139 = por %p137, %p138
      %p140 = scmp.ne.s32.totalorder %s132, %s134
      %p141 = scmp.eq.s32.totalorder %s35, 1
      %p142 = por %p140, %p141
      %p143 = scmp.ne.s32.totalorder %s134, %s135
      %p144 = scmp.eq.s32.totalorder %s35, 0
      %p145 = por %p143, %p144
      %p146 = scmp.ne.s32.totalorder %s134, %s135
      %p147 = scmp.eq.s32.totalorder %s36, 1
      %p148 = por %p146, %p147
      %p150 = scmp.ne.s32.totalorder %s135, %s149
      %p151 = scmp.eq.s32.totalorder %s36, 0
      %p152 = por %p150, %p151
      %s154 = sadd.s32 %s153, 1
      %p157 = scmp.eq.s32.totalorder %s30, 1
      %p158 = scmp.ne.s32.totalorder %s153, %s155
      %p159 = scmp.eq.s32.totalorder %s30, 0
      %p160 = por %p158, %p159
      %p161 = scmp.ne.s32.totalorder %s153, %s155
      %p162 = scmp.eq.s32.totalorder %s35, 1
      %p163 = por %p161, %p162
      %p164 = scmp.ne.s32.totalorder %s155, %s156
      %p165 = scmp.eq.s32.totalorder %s35, 0
      %p166 = por %p164, %p165
      %p167 = scmp.ne.s32.totalorder %s155, %s156
      %p168 = scmp.eq.s32.totalorder %s36, 1
      %p169 = por %p167, %p168
      %p171 = scmp.ne.s32.totalorder %s156, %s170
      %p172 = scmp.eq.s32.totalorder %s36, 0
      %p173 = por %p171, %p172
      %s175 = sadd.s32 %s174, 1
      %p178 = scmp.eq.s32.totalorder %s30, 1
      %p179 = scmp.ne.s32.totalorder %s174, %s176
      %p180 = scmp.eq.s32.totalorder %s30, 0
      %p181 = por %p179, %p180
      %p182 = scmp.ne.s32.totalorder %s174, %s176
      %p183 = scmp.eq.s32.totalorder %s35, 1
      %p184 = por %p182, %p183
      %p185 = scmp.ne.s32.totalorder %s176, %s177
      %p186 = scmp.eq.s32.totalorder %s35, 0
      %p187 = por %p185, %p186
      %p188 = scmp.ne.s32.totalorder %s176, %s177
      %p189 = scmp.eq.s32.totalorder %s36, 1
      %p190 = por %p188, %p189
      %p192 = scmp.ne.s32.totalorder %s177, %s191
      %p193 = scmp.eq.s32.totalorder %s36, 0
      %p194 = por %p192, %p193
      %s196 = sadd.s32 %s195, 1
      %p199 = scmp.eq.s32.totalorder %s30, 1
      %p200 = scmp.ne.s32.totalorder %s195, %s197
      %p201 = scmp.eq.s32.totalorder %s30, 0
      %p202 = por %p200, %p201
      %p203 = scmp.ne.s32.totalorder %s195, %s197
      %p204 = scmp.eq.s32.totalorder %s35, 1
      %p205 = por %p203, %p204
      %p206 = scmp.ne.s32.totalorder %s197, %s198
      %p207 = scmp.eq.s32.totalorder %s35, 0
      %p208 = por %p206, %p207
      %p209 = scmp.ne.s32.totalorder %s197, %s198
      %p210 = scmp.eq.s32.totalorder %s36, 1
      %p211 = por %p209, %p210
      %p213 = scmp.ne.s32.totalorder %s198, %s212
      %p214 = scmp.eq.s32.totalorder %s36, 0
      %p215 = por %p213, %p214
      %s217 = sadd.s32 %s216, 1
      %p220 = scmp.eq.s32.totalorder %s30, 1
      %p221 = scmp.ne.s32.totalorder %s216, %s218
      %p222 = scmp.eq.s32.totalorder %s30, 0
      %p223 = por %p221, %p222
      %p224 = scmp.ne.s32.totalorder %s216, %s218
      %p225 = scmp.eq.s32.totalorder %s35, 1
      %p226 = por %p224, %p225
      %p227 = scmp.ne.s32.totalorder %s218, %s219
      %p228 = scmp.eq.s32.totalorder %s35, 0
      %p229 = por %p227, %p228
      %p230 = scmp.ne.s32.totalorder %s218, %s219
      %p231 = scmp.eq.s32.totalorder %s36, 1
      %p232 = por %p230, %p231
      %p234 = scmp.ne.s32.totalorder %s219, %s233
      %p235 = scmp.eq.s32.totalorder %s36, 0
      %p236 = por %p234, %p235
      %s237 = ssub.s32 %s30, %s37
      %p238 = scmp.eq.s32.totalorder %s237, 0
      %s240 = sadd.s32 %s239, 1
      %s241 = scalar_select %p238, %s239, %s240
      %p244 = pneg %p238
      %p245 = scmp.eq.s32.totalorder %s30, 1
      %p246 = por %p244, %p245
      %p247 = scmp.ne.s32.totalorder %s239, %s242
      %p248 = scmp.eq.s32.totalorder %s30, 0
      %p249 = por %p247, %p248
      %p250 = scmp.ne.s32.totalorder %s239, %s242
      %p251 = scmp.eq.s32.totalorder %s35, 1
      %p252 = por %p250, %p251
      %p253 = scmp.ne.s32.totalorder %s242, %s243
      %p254 = scmp.eq.s32.totalorder %s35, 0
      %p255 = por %p253, %p254
      %p256 = scmp.ne.s32.totalorder %s242, %s243
      %p257 = scmp.eq.s32.totalorder %s36, 1
      %p258 = por %p256, %p257
      %p260 = scmp.ne.s32.totalorder %s243, %s259
      %p261 = scmp.eq.s32.totalorder %s36, 0
      %p262 = por %p260, %p261
      %s263 = ssub.s32 %s30, %s37
      %p264 = scmp.eq.s32.totalorder %s263, 0
      %s266 = sadd.s32 %s265, 1
      %s267 = scalar_select %p264, %s265, %s266
      %p270 = pneg %p264
      %p271 = scmp.eq.s32.totalorder %s30, 1
      %p272 = por %p270, %p271
      %p273 = scmp.ne.s32.totalorder %s265, %s268
      %p274 = scmp.eq.s32.totalorder %s30, 0
      %p275 = por %p273, %p274
      %p276 = scmp.ne.s32.totalorder %s265, %s268
      %p277 = scmp.eq.s32.totalorder %s35, 1
      %p278 = por %p276, %p277
      %p279 = scmp.ne.s32.totalorder %s268, %s269
      %p280 = scmp.eq.s32.totalorder %s35, 0
      %p281 = por %p279, %p280
      %p282 = scmp.ne.s32.totalorder %s268, %s269
      %p283 = scmp.eq.s32.totalorder %s36, 1
      %p284 = por %p282, %p283
      %p286 = scmp.ne.s32.totalorder %s269, %s285
      %p287 = scmp.eq.s32.totalorder %s36, 0
      %p288 = por %p286, %p287
      %p289 = scmp.le.s32.totalorder 1, %s30
      %p290 = scmp.lt.s32.totalorder %s30, 3
      %p291 = pnand %p289, %p290
      %p292 = pneg %p291
      // Predicated region
      $region9: #{tpu_custom_call.1} parent=5 // pred_check
        _
      $region10: #{tpu_custom_call.1} parent=5 // pred_check_branch
        %294 = sbr.rel (%p291) target = $region12
      $region11: #{tpu_custom_call.1} parent=5 // pred_region
        %s295 = ssub.s32 %s30, 1
        // Predicated region
        $region13: #{tpu_custom_call.1} parent=11 // pred_check
          %p296 = pneg %p103
        $region14: #{tpu_custom_call.1} parent=11 // pred_check_branch
          %298 = sbr.rel (%p296) target = $region16
        $region15: #{tpu_custom_call.1} parent=11 // pred_region
          _
        $region16: #{tpu_custom_call.1} parent=11 // pred_fallthru
          _
        // Predicated region
        $region17: #{tpu_custom_call.1} parent=11 // pred_check
          %p299 = pneg %p124
        $region18: #{tpu_custom_call.1} parent=11 // pred_check_branch
          %301 = sbr.rel (%p299) target = $region20
        $region19: #{tpu_custom_call.1} parent=11 // pred_region
          %s303 = ssub.s32 512, 512
          %304 = vsyncadd [#allocation6], %s303
          %s305 = sshll.u32 [#allocation7], 4
          %s306 = int_to_ptr.vmem [resolvable:$true] %s305
          %311 = dma.hbm_to_vmem [thread:$0]  %s3, 512, %s306, [#allocation6], 64, 64, 4
        $region20: #{tpu_custom_call.1} parent=11 // pred_fallthru
          _
        // Predicated region
        $region21: #{tpu_custom_call.1} parent=11 // pred_check
          %p312 = pneg %p145
        $region22: #{tpu_custom_call.1} parent=11 // pred_check_branch
          %314 = sbr.rel (%p312) target = $region24
        $region23: #{tpu_custom_call.1} parent=11 // pred_region
          _
        $region24: #{tpu_custom_call.1} parent=11 // pred_fallthru
          _
        // Predicated region
        $region25: #{tpu_custom_call.1} parent=11 // pred_check
          %p315 = pneg %p166
        $region26: #{tpu_custom_call.1} parent=11 // pred_check_branch
          %317 = sbr.rel (%p315) target = $region28
        $region27: #{tpu_custom_call.1} parent=11 // pred_region
          %s319 = ssub.s32 16, 16
          %320 = vsyncadd [#allocation9], %s319
          %s322 = sshll.u32 [#allocation8], 4
          %s323 = int_to_ptr.vmem [resolvable:$true] %s322
          %325 = dma.hbm_to_vmem [thread:$0]  %s5, 16, %s323, [#allocation9]
        $region28: #{tpu_custom_call.1} parent=11 // pred_fallthru
          _
        // Predicated region
        $region29: #{tpu_custom_call.1} parent=11 // pred_check
          %p326 = pneg %p187
        $region30: #{tpu_custom_call.1} parent=11 // pred_check_branch
          %328 = sbr.rel (%p326) target = $region32
        $region31: #{tpu_custom_call.1} parent=11 // pred_region
          _
        $region32: #{tpu_custom_call.1} parent=11 // pred_fallthru
          _
        // Predicated region
        $region33: #{tpu_custom_call.1} parent=11 // pred_check
          %p329 = pneg %p208
        $region34: #{tpu_custom_call.1} parent=11 // pred_check_branch
          %331 = sbr.rel (%p329) target = $region36
        $region35: #{tpu_custom_call.1} parent=11 // pred_region
          _
        $region36: #{tpu_custom_call.1} parent=11 // pred_fallthru
          _
        // Predicated region
        $region37: #{tpu_custom_call.1} parent=11 // pred_check
          %p332 = pneg %p229
        $region38: #{tpu_custom_call.1} parent=11 // pred_check_branch
          %334 = sbr.rel (%p332) target = $region40
        $region39: #{tpu_custom_call.1} parent=11 // pred_region
          %s336 = ssub.s32 512, 512
          %337 = vsyncadd [#allocation9], %s336
          %s338 = sshll.u32 [#allocation10], 4
          %s339 = int_to_ptr.vmem [resolvable:$true] %s338
          %344 = dma.hbm_to_vmem [thread:$0]  %s8, 512, %s339, [#allocation9], 64, 64, 4
        $region40: #{tpu_custom_call.1} parent=11 // pred_fallthru
          _
      $region12: #{tpu_custom_call.1} parent=5 // pred_fallthru
        _
      %p345 = scmp.lt.s32.totalorder %s30, 2
      // Predicated region
      $region41: #{tpu_custom_call.1} parent=5 // pred_check
        %p346 = pneg %p345
      $region42: #{tpu_custom_call.1} parent=5 // pred_check_branch
        %348 = sbr.rel (%p346) target = $region44
      $region43: #{tpu_custom_call.1} parent=5 // pred_region
        // Predicated region
        $region45: #{tpu_custom_call.1} parent=43 // pred_check
          %p349 = pneg %p50
        $region46: #{tpu_custom_call.1} parent=43 // pred_check_branch
          %351 = sbr.rel (%p349) target = $region48
        $region47: #{tpu_custom_call.1} parent=43 // pred_region
          %s352 = sand.u32 %s40, 1
          %s353 = scalar_lea.sflag [#allocation3], %s352
          %s354 = sand.u32 %s40, 1
          %s355 = smul.addr %s354, 8
          %s356 = scalar_lea.vmem [#allocation2], %s355
          %s358 = ssub.s32 128, 128
          %359 = vsyncadd %s353, %s358
          %s360 = smul.addr %s30, 128
          %s361 = scalar_lea.hbm %s0, %s360
          %s363 = sshll.u32 %s356, 4
          %s364 = int_to_ptr.vmem [resolvable:$true] %s363
          %366 = dma.hbm_to_vmem [thread:$0]  %s361, 128, %s364, %s353
        $region48: #{tpu_custom_call.1} parent=43 // pred_fallthru
          _
        // Predicated region
        $region49: #{tpu_custom_call.1} parent=43 // pred_check
          %p367 = pneg %p76
        $region50: #{tpu_custom_call.1} parent=43 // pred_check_branch
          %369 = sbr.rel (%p367) target = $region52
        $region51: #{tpu_custom_call.1} parent=43 // pred_region
          %s370 = sand.u32 %s30, 1
          %s371 = scalar_lea.sflag [#allocation6], %s370
          %s372 = sand.u32 %s66, 1
          %s373 = smul.addr %s372, 8
          %s374 = scalar_lea.vmem [#allocation5], %s373
          %s376 = ssub.s32 128, 128
          %377 = vsyncadd %s371, %s376
          %s378 = smul.addr %s30, 128
          %s379 = scalar_lea.hbm %s1, %s378
          %s381 = sshll.u32 %s374, 4
          %s382 = int_to_ptr.vmem [resolvable:$true] %s381
          %384 = dma.hbm_to_vmem [thread:$0]  %s379, 128, %s382, %s371
        $region52: #{tpu_custom_call.1} parent=43 // pred_fallthru
          _
      $region44: #{tpu_custom_call.1} parent=5 // pred_fallthru
        _
      %p385 = scmp.le.s32.totalorder 1, %s30
      %p386 = scmp.lt.s32.totalorder %s30, 3
      %p387 = pnand %p385, %p386
      %p388 = pneg %p387
      // Predicated region
      $region53: #{tpu_custom_call.1} parent=5 // pred_check
        _
      $region54: #{tpu_custom_call.1} parent=5 // pred_check_branch
        %390 = sbr.rel (%p387) target = $region56
      $region55: #{tpu_custom_call.1} parent=5 // pred_region
        %s391 = ssub.s32 %s30, 1
        %s392 = sand.u32 %s43, 1
        %s393 = scalar_lea.sflag [#allocation3], %s392
        %s394 = sand.u32 %s43, 1
        %s395 = smul.addr %s394, 8
        %s396 = scalar_lea.vmem [#allocation2], %s395
        // Predicated region
        $region57: #{tpu_custom_call.1} parent=55 // pred_check
          %p397 = pneg %p56
        $region58: #{tpu_custom_call.1} parent=55 // pred_check_branch
          %399 = sbr.rel (%p397) target = $region60
        $region59: #{tpu_custom_call.1} parent=55 // pred_region
          %400 = dma.done %s393, 128
        $region60: #{tpu_custom_call.1} parent=55 // pred_fallthru
          _
        %s401 = sand.u32 %s35, 1
        %s402 = scalar_lea.sflag [#allocation6], %s401
        %s403 = sand.u32 %s69, 1
        %s404 = smul.addr %s403, 8
        %s405 = scalar_lea.vmem [#allocation5], %s404
        // Predicated region
        $region61: #{tpu_custom_call.1} parent=55 // pred_check
          %p406 = pneg %p82
        $region62: #{tpu_custom_call.1} parent=55 // pred_check_branch
          %408 = sbr.rel (%p406) target = $region64
        $region63: #{tpu_custom_call.1} parent=55 // pred_region
          %409 = dma.done %s402, 128
        $region64: #{tpu_custom_call.1} parent=55 // pred_fallthru
          _
        // Predicated region
        $region65: #{tpu_custom_call.1} parent=55 // pred_check
          %p410 = pneg %p124
        $region66: #{tpu_custom_call.1} parent=55 // pred_check_branch
          %412 = sbr.rel (%p410) target = $region68
        $region67: #{tpu_custom_call.1} parent=55 // pred_region
          %413 = dma.done [#allocation6], 512
        $region68: #{tpu_custom_call.1} parent=55 // pred_fallthru
          _
        // Predicated region
        $region69: #{tpu_custom_call.1} parent=55 // pred_check
          %p414 = pneg %p166
        $region70: #{tpu_custom_call.1} parent=55 // pred_check_branch
          %416 = sbr.rel (%p414) target = $region72
        $region71: #{tpu_custom_call.1} parent=55 // pred_region
          %417 = dma.done [#allocation9], 16
        $region72: #{tpu_custom_call.1} parent=55 // pred_fallthru
          _
        // Predicated region
        $region73: #{tpu_custom_call.1} parent=55 // pred_check
          %p418 = pneg %p229
        $region74: #{tpu_custom_call.1} parent=55 // pred_check_branch
          %420 = sbr.rel (%p418) target = $region76
        $region75: #{tpu_custom_call.1} parent=55 // pred_region
          %421 = dma.done [#allocation9], 512
        $region76: #{tpu_custom_call.1} parent=55 // pred_fallthru
          _
        %s422 = sand.u32 %s43, 1
        %s423 = scalar_lea.sflag [#allocation3], %s422
        %s424 = sand.u32 %s43, 1
        %s425 = smul.addr %s424, 8
        %s426 = scalar_lea.vmem [#allocation2], %s425
        %p427 = pneg %p56
        %p428 = pneg %p53
        %s429 = sand.u32 %s35, 1
        %s430 = scalar_lea.sflag [#allocation6], %s429
        %s431 = sand.u32 %s69, 1
        %s432 = smul.addr %s431, 8
        %s433 = scalar_lea.vmem [#allocation5], %s432
        %p434 = pneg %p82
        %p435 = pneg %p79
        %p436 = pneg %p103
        %p437 = pneg %p100
        %p438 = pneg %p124
        %p439 = pneg %p121
        %p440 = pneg %p145
        %p441 = pneg %p142
        %p442 = pneg %p166
        %p443 = pneg %p163
        %p444 = pneg %p187
        %p445 = pneg %p184
        %p446 = pneg %p208
        %p447 = pneg %p205
        %p448 = pneg %p229
        %p449 = pneg %p226
        %p450 = pneg %p255
        %p451 = pneg %p252
        %s452 = sand.u32 %s242, 1
        %s453 = scalar_lea.sflag [#allocation4], %s452
        %s454 = sand.u32 %s242, 1
        %s455 = smul.addr %s454, 8
        %s456 = scalar_lea.vmem [#allocation11], %s455
        %p457 = pneg %p281
        %p458 = pneg %p278
        %s459 = sand.u32 %s268, 1
        %s460 = scalar_lea.sflag [#allocation13], %s459
        %s461 = sand.u32 %s268, 1
        %s462 = smul.addr %s461, 8
        %s463 = scalar_lea.vmem [#allocation12], %s462
        %v465 = vld [vmem:[%s396] sm:$0xff]
        %v466 = vld [vmem:[%s405] sm:$0xff]
        %v467 = vadd.f32 %v465, %v466
        %vm468 = vcmask 523264
        %469 = vst.msk [vmem:[%s463] sm:$0xff] %vm468, %v467
        %v470 = vmul.f32 %v467, %v467
        %v471 = vsel %vm468, %v470, 0.0
        %472 = vadd.xlane.f32.xlu0 %v471
        %v473 = vpop.xlane.xlu0 %472
        %v474 = vrcp.pop 64.0
        %v475 = vmul.f32 %v473, %v474
        %v476 = vadd.f32 %v475, 1e-06
        %v477 = vrsqrt.pop %v476
        %v478 = vmul.f32 %v467, %v477
        %v479 = vld [vmem:[%s2] sm:$0x1]
        %v481 = vlaneseq
        %v482 = vshrl.u32 %v481, 7
        %v483 = vsub.s32 0, %v482
        %v484 = vrot.slane %v479, %v483
        %v486 = vmul.f32 %v478, %v484
        %v487 = vpack.c.bf16 %v486, %v486
        %v488 = vld [vmem:[#allocation7] sm:$0xf]
        %v489 = vld [vmem:[#allocation7 + $0x4] sm:$0xf]
        %v490 = vld [vmem:[#allocation7 + $0x8] sm:$0xf]
        %v491 = vld [vmem:[#allocation7 + $0xc] sm:$0xf]
        %v492 = vld [vmem:[#allocation7 + $0x10] sm:$0xf]
        %v493 = vld [vmem:[#allocation7 + $0x14] sm:$0xf]
        %v494 = vld [vmem:[#allocation7 + $0x18] sm:$0xf]
        %v495 = vld [vmem:[#allocation7 + $0x1c] sm:$0xf]
        %v504 = vunpack.c.l.b16 %v488
        %v505 = vunpack.c.l.b16 %v489
        %v506 = vunpack.c.l.b16 %v490
        %v507 = vunpack.c.l.b16 %v491
        %v508 = vunpack.c.l.b16 %v492
        %v509 = vunpack.c.l.b16 %v493
        %v510 = vunpack.c.l.b16 %v494
        %v511 = vunpack.c.l.b16 %v495
        %v512 = vpack.c.b16 %v505, %v504
        %v513 = vpack.c.b16 %v507, %v506
        %v514 = vpack.c.b16 %v509, %v508
        %v515 = vpack.c.b16 %v511, %v510
        %v521 = vsel %vm468, %v487, 0
        %523 = vmatprep.subr.bf16.mxu0 0
        %524 = vmatpush1.bf16.msra.mxu0 %v512
        %525 = vmatprep.subr.bf16.mxu0 0
        %526 = vmatpush1.bf16.msra.mxu0 %v513
        %527 = vmatprep.subr.bf16.mxu0 0
        %528 = vmatpush1.bf16.msra.mxu0 %v514
        %529 = vmatprep.subr.bf16.mxu0 0
        %530 = vmatpush1.bf16.msra.mxu0 %v515
        %531 = vmatprep.subr.bf16.mxu0 0
        %532 = vmatpush1.bf16.msra.mxu0 0
        %533 = vmatprep.subr.bf16.mxu0 0
        %534 = vmatpush1.bf16.msra.mxu0 0
        %535 = vmatprep.subr.bf16.mxu0 0
        %536 = vmatpush1.bf16.msra.mxu0 0
        %537 = vmatprep.subr.bf16.mxu0 0
        %538 = vmatpush1.bf16.msra.mxu0 0
        %539 = vmatprep.subr.bf16.mxu0 0
        %540 = vmatpush1.bf16.msra.mxu0 0
        %541 = vmatprep.subr.bf16.mxu0 0
        %542 = vmatpush1.bf16.msra.mxu0 0
        %543 = vmatprep.subr.bf16.mxu0 0
        %544 = vmatpush1.bf16.msra.mxu0 0
        %545 = vmatprep.subr.bf16.mxu0 0
        %546 = vmatpush1.bf16.msra.mxu0 0
        %547 = vmatprep.subr.bf16.mxu0 0
        %548 = vmatpush1.bf16.msra.mxu0 0
        %549 = vmatprep.subr.bf16.mxu0 0
        %550 = vmatpush1.bf16.msra.mxu0 0
        %551 = vmatprep.subr.bf16.mxu0 0
        %552 = vmatpush1.bf16.msra.mxu0 0
        %553 = vmatprep.subr.bf16.mxu0 0
        %554 = vmatpush1.bf16.msra.mxu0 0
        %555 = vmatprep.mubr.bf16.mxu0 0
        %556 = vmatmul.mubr.bf16.gmra.mrb[0].mxu0 %v521
        %v557 = vpop.f32.mrb[0].mxu0
        %v558 = vadd.f32 0.0, %v557
        %v559 = vpop.f32.mrb[0].mxu0
        %v560 = vpop.f32.mrb[0].mxu0
        %v561 = vpop.f32.mrb[0].mxu0
        %562 = vdwg.mxu0
        %v563 = vld [vmem:[%s6] sm:$0xff]
        %v564 = vld [vmem:[%s7] sm:$0xff]
        %v565 = vld [vmem:[%s4] sm:$0x1]
        %v566 = vld [vmem:[#allocation8] sm:$0x1]
        %v567 = vmul.f32 %v558, %v558
        %569 = vrot.lane.b32.xlu0 %v567, 64
        %v570 = vpop.permute.xlu0 %569
        %vm572 = vcmask 130048
        %v573 = vsel %vm572, %v570, 0.0
        %574 = vadd.xlane.f32.xlu0 %v573
        %v575 = vpop.xlane.xlu0 %574
        %v576 = vrcp.pop 16.0
        %v577 = vmul.f32 %v575, %v576
        %v578 = vadd.f32 %v577, 1e-06
        %v579 = vrsqrt.pop %v578
        %v580 = vmul.f32 %v558, %v579
        %v582 = vlaneseq
        %v583 = vshrl.u32 %v582, 7
        %v584 = vsub.s32 0, %v583
        %v585 = vrot.slane %v566, %v584
        %586 = vrot.lane.b32.xlu0 %v585, 64
        %v587 = vpop.permute.xlu0 %586
        %v589 = vmul.f32 %v580, %v587
        %v590 = vsub.f32 0.0, %v589
        %592 = vrot.lane.b32.xlu0 %v590, 56
        %v593 = vpop.permute.xlu0 %592
        %596 = vrot.lane.b32.xlu0 %v589, 72
        %v597 = vpop.permute.xlu0 %596
        %vm599 = vcmask 64512
        %v600 = vsel %vm599, %v593, %v597
        %602 = vrot.lane.b32.xlu0 %v563, 64
        %v603 = vpop.permute.xlu0 %602
        %v605 = vmul.f32 %v589, %v603
        %v606 = vmul.f32 %v600, %v564
        %608 = vrot.lane.b32.xlu0 %v606, 64
        %v609 = vpop.permute.xlu0 %608
        %v611 = vadd.f32 %v605, %v609
        %v612 = vpack.c.bf16 %v611, %v611
        %v613 = vpack.c.bf16 %v558, %v558
        %614 = vrot.lane.b32.xlu0 %v567, 48
        %v615 = vpop.permute.xlu0 %614
        %v617 = vsel %vm572, %v615, 0.0
        %618 = vadd.xlane.f32.xlu0 %v617
        %v619 = vpop.xlane.xlu0 %618
        %v620 = vmul.f32 %v619, %v576
        %v621 = vadd.f32 %v620, 1e-06
        %v622 = vrsqrt.pop %v621
        %v623 = vmul.f32 %v558, %v622
        %624 = vrot.lane.b32.xlu0 %v585, 80
        %v625 = vpop.permute.xlu0 %624
        %v627 = vmul.f32 %v623, %v625
        %v628 = vsub.f32 0.0, %v627
        %630 = vrot.lane.b32.xlu0 %v628, 40
        %v631 = vpop.permute.xlu0 %630
        %634 = vrot.lane.b32.xlu0 %v627, 56
        %v635 = vpop.permute.xlu0 %634
        %v637 = vsel %vm599, %v631, %v635
        %638 = vrot.lane.b32.xlu0 %v563, 80
        %v639 = vpop.permute.xlu0 %638
        %v641 = vmul.f32 %v627, %v639
        %v642 = vmul.f32 %v637, %v564
        %644 = vrot.lane.b32.xlu0 %v642, 80
        %v645 = vpop.permute.xlu0 %644
        %v647 = vadd.f32 %v641, %v645
        %v648 = vpack.c.bf16 %v647, %v647
        %v649 = vlaneseq
        %v650 = vshrl.u32 %v649, 7
        %v651 = vlaneseq
        %v652 = vand.u32 %v651, 127
        %vm653 = vcmp.le.s32.totalorder %v652, %v650
        %v654 = vsel %vm572, %v567, 0.0
        %655 = vadd.xlane.f32.xlu0 %v654
        %v656 = vpop.xlane.xlu0 %655
        %v657 = vmul.f32 %v656, %v576
        %v658 = vadd.f32 %v657, 1e-06
        %v659 = vrsqrt.pop %v658
        %v660 = vmul.f32 %v558, %v659
        %v662 = vlaneseq
        %v663 = vshrl.u32 %v662, 7
        %v664 = vsub.s32 0, %v663
        %v665 = vrot.slane %v565, %v664
        %v667 = vmul.f32 %v660, %v665
        %v668 = vsub.f32 0.0, %v667
        %670 = vrot.lane.b32.xlu0 %v668, 120
        %v671 = vpop.permute.xlu0 %670
        %674 = vrot.lane.b32.xlu0 %v667, 8
        %v675 = vpop.permute.xlu0 %674
        %v677 = vsel %vm599, %v671, %v675
        %v678 = vmul.f32 %v667, %v563
        %v679 = vmul.f32 %v677, %v564
        %v680 = vadd.f32 %v678, %v679
        %v681 = vpack.c.bf16 %v680, %v680
        %683 = vrot.lane.b32.xlu0 %v612, 64
        %v684 = vpop.permute.xlu0 %683
        %v686 = vsel %vm572, %v681, 0
        %v689 = vsel %vm572, %v684, 0
        %691 = vmatprep.subr.bf16.mxu0 0
        %692 = vmatpush1.bf16.xpose.msra.mxu0 %v689
        %693 = vmatprep.subr.bf16.mxu0 0
        %694 = vmatpush1.bf16.xpose.msra.mxu0 0
        %695 = vmatprep.subr.bf16.mxu0 0
        %696 = vmatpush1.bf16.xpose.msra.mxu0 0
        %697 = vmatprep.subr.bf16.mxu0 0
        %698 = vmatpush1.bf16.xpose.msra.mxu0 0
        %699 = vmatprep.subr.bf16.mxu0 0
        %700 = vmatpush1.bf16.xpose.msra.mxu0 0
        %701 = vmatprep.subr.bf16.mxu0 0
        %702 = vmatpush1.bf16.xpose.msra.mxu0 0
        %703 = vmatprep.subr.bf16.mxu0 0
        %704 = vmatpush1.bf16.xpose.msra.mxu0 0
        %705 = vmatprep.subr.bf16.mxu0 0
        %706 = vmatpush1.bf16.xpose.msra.mxu0 0
        %707 = vmatprep.subr.bf16.mxu0 0
        %708 = vmatpush1.bf16.xpose.msra.mxu0 0
        %709 = vmatprep.subr.bf16.mxu0 0
        %710 = vmatpush1.bf16.xpose.msra.mxu0 0
        %711 = vmatprep.subr.bf16.mxu0 0
        %712 = vmatpush1.bf16.xpose.msra.mxu0 0
        %713 = vmatprep.subr.bf16.mxu0 0
        %714 = vmatpush1.bf16.xpose.msra.mxu0 0
        %715 = vmatprep.subr.bf16.mxu0 0
        %716 = vmatpush1.bf16.xpose.msra.mxu0 0
        %717 = vmatprep.subr.bf16.mxu0 0
        %718 = vmatpush1.bf16.xpose.msra.mxu0 0
        %719 = vmatprep.subr.bf16.mxu0 0
        %720 = vmatpush1.bf16.xpose.msra.mxu0 0
        %721 = vmatprep.subr.bf16.mxu0 0
        %722 = vmatpush1.bf16.xpose.msra.mxu0 0
        %723 = vmatprep.mubr.bf16.mxu0 0
        %724 = vmatmul.mubr.bf16.gmra.mrb[0].mxu0 %v686
        %v725 = vpop.f32.mrb[0].mxu0
        %v726 = vadd.f32 0.0, %v725
        %v727 = vpop.f32.mrb[0].mxu0
        %v728 = vpop.f32.mrb[0].mxu0
        %v729 = vpop.f32.mrb[0].mxu0
        %730 = vdwg.mxu0
        %v731 = vmul.f32 %v726, 0.25
        %v732 = vsel %vm653, %v731, -1e+30
        %v733 = vsel %vm599, %v732, -inf
        %734 = vmax.xlane.f32.xlu0 %v733
        %v735 = vpop.xlane.xlu0 %734
        %v736 = vsub.f32 %v732, %v735
        %v737 = vmul.f32 %v736, 1.442695
        %v738 = vpow.pop %v737
        %v739 = vsel %vm599, %v738, 0.0
        %740 = vadd.xlane.f32.xlu0 %v739
        %v741 = vpop.xlane.xlu0 %740
        %v742 = vrcp.pop %v741
        %v743 = vmul.f32 %v738, %v742
        %v744 = vpack.c.bf16 %v743, %v743
        %746 = vrot.lane.b32.xlu0 %v613, 32
        %v747 = vpop.permute.xlu0 %746
        %v749 = vsel %vm599, %v744, 0
        %vm751 = vcmask 1043456
        %v753 = vsel %vm751, %v747, 0
        %755 = vmatprep.subr.bf16.mxu0 0
        %756 = vmatpush1.bf16.msra.mxu0 %v753
        %757 = vmatprep.subr.bf16.mxu0 0
        %758 = vmatpush1.bf16.msra.mxu0 0
        %759 = vmatprep.subr.bf16.mxu0 0
        %760 = vmatpush1.bf16.msra.mxu0 0
        %761 = vmatprep.subr.bf16.mxu0 0
        %762 = vmatpush1.bf16.msra.mxu0 0
        %763 = vmatprep.subr.bf16.mxu0 0
        %764 = vmatpush1.bf16.msra.mxu0 0
        %765 = vmatprep.subr.bf16.mxu0 0
        %766 = vmatpush1.bf16.msra.mxu0 0
        %767 = vmatprep.subr.bf16.mxu0 0
        %768 = vmatpush1.bf16.msra.mxu0 0
        %769 = vmatprep.subr.bf16.mxu0 0
        %770 = vmatpush1.bf16.msra.mxu0 0
        %771 = vmatprep.subr.bf16.mxu0 0
        %772 = vmatpush1.bf16.msra.mxu0 0
        %773 = vmatprep.subr.bf16.mxu0 0
        %774 = vmatpush1.bf16.msra.mxu0 0
        %775 = vmatprep.subr.bf16.mxu0 0
        %776 = vmatpush1.bf16.msra.mxu0 0
        %777 = vmatprep.subr.bf16.mxu0 0
        %778 = vmatpush1.bf16.msra.mxu0 0
        %779 = vmatprep.subr.bf16.mxu0 0
        %780 = vmatpush1.bf16.msra.mxu0 0
        %781 = vmatprep.subr.bf16.mxu0 0
        %782 = vmatpush1.bf16.msra.mxu0 0
        %783 = vmatprep.subr.bf16.mxu0 0
        %784 = vmatpush1.bf16.msra.mxu0 0
        %785 = vmatprep.subr.bf16.mxu0 0
        %786 = vmatpush1.bf16.msra.mxu0 0
        %787 = vmatprep.mubr.bf16.mxu0 0
        %788 = vmatmul.mubr.bf16.gmra.mrb[0].mxu0 %v749
        %v789 = vpop.f32.mrb[0].mxu0
        %v790 = vadd.f32 0.0, %v789
        %v791 = vpop.f32.mrb[0].mxu0
        %v792 = vpop.f32.mrb[0].mxu0
        %v793 = vpop.f32.mrb[0].mxu0
        %794 = vdwg.mxu0
        %795 = vrot.lane.b32.xlu0 %v567, 112
        %v796 = vpop.permute.xlu0 %795
        %v798 = vsel %vm572, %v796, 0.0
        %799 = vadd.xlane.f32.xlu0 %v798
        %v800 = vpop.xlane.xlu0 %799
        %v801 = vmul.f32 %v800, %v576
        %v802 = vadd.f32 %v801, 1e-06
        %v803 = vrsqrt.pop %v802
        %v804 = vmul.f32 %v558, %v803
        %805 = vrot.lane.b32.xlu0 %v665, 16
        %v806 = vpop.permute.xlu0 %805
        %v808 = vmul.f32 %v804, %v806
        %v809 = vsub.f32 0.0, %v808
        %811 = vrot.lane.b32.xlu0 %v809, 104
        %v812 = vpop.permute.xlu0 %811
        %815 = vrot.lane.b32.xlu0 %v808, 120
        %v816 = vpop.permute.xlu0 %815
        %v818 = vsel %vm599, %v812, %v816
        %819 = vrot.lane.b32.xlu0 %v563, 16
        %v820 = vpop.permute.xlu0 %819
        %v822 = vmul.f32 %v808, %v820
        %v823 = vmul.f32 %v818, %v564
        %825 = vrot.lane.b32.xlu0 %v823, 16
        %v826 = vpop.permute.xlu0 %825
        %v828 = vadd.f32 %v822, %v826
        %v829 = vpack.c.bf16 %v828, %v828
        %831 = vrot.lane.b32.xlu0 %v829, 112
        %v832 = vpop.permute.xlu0 %831
        %v834 = vsel %vm572, %v832, 0
        %836 = vmatprep.subr.bf16.mxu0 0
        %837 = vmatpush1.bf16.xpose.msra.mxu0 %v689
        %838 = vmatprep.subr.bf16.mxu0 0
        %839 = vmatpush1.bf16.xpose.msra.mxu0 0
        %840 = vmatprep.subr.bf16.mxu0 0
        %841 = vmatpush1.bf16.xpose.msra.mxu0 0
        %842 = vmatprep.subr.bf16.mxu0 0
        %843 = vmatpush1.bf16.xpose.msra.mxu0 0
        %844 = vmatprep.subr.bf16.mxu0 0
        %845 = vmatpush1.bf16.xpose.msra.mxu0 0
        %846 = vmatprep.subr.bf16.mxu0 0
        %847 = vmatpush1.bf16.xpose.msra.mxu0 0
        %848 = vmatprep.subr.bf16.mxu0 0
        %849 = vmatpush1.bf16.xpose.msra.mxu0 0
        %850 = vmatprep.subr.bf16.mxu0 0
        %851 = vmatpush1.bf16.xpose.msra.mxu0 0
        %852 = vmatprep.subr.bf16.mxu0 0
        %853 = vmatpush1.bf16.xpose.msra.mxu0 0
        %854 = vmatprep.subr.bf16.mxu0 0
        %855 = vmatpush1.bf16.xpose.msra.mxu0 0
        %856 = vmatprep.subr.bf16.mxu0 0
        %857 = vmatpush1.bf16.xpose.msra.mxu0 0
        %858 = vmatprep.subr.bf16.mxu0 0
        %859 = vmatpush1.bf16.xpose.msra.mxu0 0
        %860 = vmatprep.subr.bf16.mxu0 0
        %861 = vmatpush1.bf16.xpose.msra.mxu0 0
        %862 = vmatprep.subr.bf16.mxu0 0
        %863 = vmatpush1.bf16.xpose.msra.mxu0 0
        %864 = vmatprep.subr.bf16.mxu0 0
        %865 = vmatpush1.bf16.xpose.msra.mxu0 0
        %866 = vmatprep.subr.bf16.mxu0 0
        %867 = vmatpush1.bf16.xpose.msra.mxu0 0
        %868 = vmatprep.mubr.bf16.mxu0 0
        %869 = vmatmul.mubr.bf16.gmra.mrb[0].mxu0 %v834
        %v870 = vpop.f32.mrb[0].mxu0
        %v871 = vadd.f32 0.0, %v870
        %v872 = vpop.f32.mrb[0].mxu0
        %v873 = vpop.f32.mrb[0].mxu0
        %v874 = vpop.f32.mrb[0].mxu0
        %875 = vdwg.mxu0
        %v876 = vmul.f32 %v871, 0.25
        %v877 = vsel %vm653, %v876, -1e+30
        %v878 = vsel %vm599, %v877, -inf
        %879 = vmax.xlane.f32.xlu0 %v878
        %v880 = vpop.xlane.xlu0 %879
        %v881 = vsub.f32 %v877, %v880
        %v882 = vmul.f32 %v881, 1.442695
        %v883 = vpow.pop %v882
        %v884 = vsel %vm599, %v883, 0.0
        %885 = vadd.xlane.f32.xlu0 %v884
        %v886 = vpop.xlane.xlu0 %885
        %v887 = vrcp.pop %v886
        %v888 = vmul.f32 %v883, %v887
        %v889 = vpack.c.bf16 %v888, %v888
        %v891 = vsel %vm599, %v889, 0
        %893 = vmatprep.subr.bf16.mxu0 0
        %894 = vmatpush1.bf16.msra.mxu0 %v753
        %895 = vmatprep.subr.bf16.mxu0 0
        %896 = vmatpush1.bf16.msra.mxu0 0
        %897 = vmatprep.subr.bf16.mxu0 0
        %898 = vmatpush1.bf16.msra.mxu0 0
        %899 = vmatprep.subr.bf16.mxu0 0
        %900 = vmatpush1.bf16.msra.mxu0 0
        %901 = vmatprep.subr.bf16.mxu0 0
        %902 = vmatpush1.bf16.msra.mxu0 0
        %903 = vmatprep.subr.bf16.mxu0 0
        %904 = vmatpush1.bf16.msra.mxu0 0
        %905 = vmatprep.subr.bf16.mxu0 0
        %906 = vmatpush1.bf16.msra.mxu0 0
        %907 = vmatprep.subr.bf16.mxu0 0
        %908 = vmatpush1.bf16.msra.mxu0 0
        %909 = vmatprep.subr.bf16.mxu0 0
        %910 = vmatpush1.bf16.msra.mxu0 0
        %911 = vmatprep.subr.bf16.mxu0 0
        %912 = vmatpush1.bf16.msra.mxu0 0
        %913 = vmatprep.subr.bf16.mxu0 0
        %914 = vmatpush1.bf16.msra.mxu0 0
        %915 = vmatprep.subr.bf16.mxu0 0
        %916 = vmatpush1.bf16.msra.mxu0 0
        %917 = vmatprep.subr.bf16.mxu0 0
        %918 = vmatpush1.bf16.msra.mxu0 0
        %919 = vmatprep.subr.bf16.mxu0 0
        %920 = vmatpush1.bf16.msra.mxu0 0
        %921 = vmatprep.subr.bf16.mxu0 0
        %922 = vmatpush1.bf16.msra.mxu0 0
        %923 = vmatprep.subr.bf16.mxu0 0
        %924 = vmatpush1.bf16.msra.mxu0 0
        %925 = vmatprep.mubr.bf16.mxu0 0
        %926 = vmatmul.mubr.bf16.gmra.mrb[0].mxu0 %v891
        %v927 = vpop.f32.mrb[0].mxu0
        %v928 = vadd.f32 0.0, %v927
        %v929 = vpop.f32.mrb[0].mxu0
        %v930 = vpop.f32.mrb[0].mxu0
        %v931 = vpop.f32.mrb[0].mxu0
        %932 = vdwg.mxu0
        %933 = vrot.lane.b32.xlu0 %v567, 96
        %v934 = vpop.permute.xlu0 %933
        %v936 = vsel %vm572, %v934, 0.0
        %937 = vadd.xlane.f32.xlu0 %v936
        %v938 = vpop.xlane.xlu0 %937
        %v939 = vmul.f32 %v938, %v576
        %v940 = vadd.f32 %v939, 1e-06
        %v941 = vrsqrt.pop %v940
        %v942 = vmul.f32 %v558, %v941
        %943 = vrot.lane.b32.xlu0 %v665, 32
        %v944 = vpop.permute.xlu0 %943
        %v946 = vmul.f32 %v942, %v944
        %v947 = vsub.f32 0.0, %v946
        %949 = vrot.lane.b32.xlu0 %v947, 88
        %v950 = vpop.permute.xlu0 %949
        %953 = vrot.lane.b32.xlu0 %v946, 104
        %v954 = vpop.permute.xlu0 %953
        %v956 = vsel %vm599, %v950, %v954
        %957 = vrot.lane.b32.xlu0 %v563, 32
        %v958 = vpop.permute.xlu0 %957
        %v960 = vmul.f32 %v946, %v958
        %v961 = vmul.f32 %v956, %v564
        %963 = vrot.lane.b32.xlu0 %v961, 32
        %v964 = vpop.permute.xlu0 %963
        %v966 = vadd.f32 %v960, %v964
        %v967 = vpack.c.bf16 %v966, %v966
        %969 = vrot.lane.b32.xlu0 %v967, 96
        %v970 = vpop.permute.xlu0 %969
        %972 = vrot.lane.b32.xlu0 %v648, 48
        %v973 = vpop.permute.xlu0 %972
        %v975 = vsel %vm572, %v970, 0
        %v978 = vsel %vm572, %v973, 0
        %980 = vmatprep.subr.bf16.mxu0 0
        %981 = vmatpush1.bf16.xpose.msra.mxu0 %v978
        %982 = vmatprep.subr.bf16.mxu0 0
        %983 = vmatpush1.bf16.xpose.msra.mxu0 0
        %984 = vmatprep.subr.bf16.mxu0 0
        %985 = vmatpush1.bf16.xpose.msra.mxu0 0
        %986 = vmatprep.subr.bf16.mxu0 0
        %987 = vmatpush1.bf16.xpose.msra.mxu0 0
        %988 = vmatprep.subr.bf16.mxu0 0
        %989 = vmatpush1.bf16.xpose.msra.mxu0 0
        %990 = vmatprep.subr.bf16.mxu0 0
        %991 = vmatpush1.bf16.xpose.msra.mxu0 0
        %992 = vmatprep.subr.bf16.mxu0 0
        %993 = vmatpush1.bf16.xpose.msra.mxu0 0
        %994 = vmatprep.subr.bf16.mxu0 0
        %995 = vmatpush1.bf16.xpose.msra.mxu0 0
        %996 = vmatprep.subr.bf16.mxu0 0
        %997 = vmatpush1.bf16.xpose.msra.mxu0 0
        %998 = vmatprep.subr.bf16.mxu0 0
        %999 = vmatpush1.bf16.xpose.msra.mxu0 0
        %1000 = vmatprep.subr.bf16.mxu0 0
        %1001 = vmatpush1.bf16.xpose.msra.mxu0 0
        %1002 = vmatprep.subr.bf16.mxu0 0
        %1003 = vmatpush1.bf16.xpose.msra.mxu0 0
        %1004 = vmatprep.subr.bf16.mxu0 0
        %1005 = vmatpush1.bf16.xpose.msra.mxu0 0
        %1006 = vmatprep.subr.bf16.mxu0 0
        %1007 = vmatpush1.bf16.xpose.msra.mxu0 0
        %1008 = vmatprep.subr.bf16.mxu0 0
        %1009 = vmatpush1.bf16.xpose.msra.mxu0 0
        %1010 = vmatprep.subr.bf16.mxu0 0
        %1011 = vmatpush1.bf16.xpose.msra.mxu0 0
        %1012 = vmatprep.mubr.bf16.mxu0 0
        %1013 = vmatmul.mubr.bf16.gmra.mrb[0].mxu0 %v975
        %v1014 = vpop.f32.mrb[0].mxu0
        %v1015 = vadd.f32 0.0, %v1014
        %v1016 = vpop.f32.mrb[0].mxu0
        %v1017 = vpop.f32.mrb[0].mxu0
        %v1018 = vpop.f32.mrb[0].mxu0
        %1019 = vdwg.mxu0
        %v1020 = vmul.f32 %v1015, 0.25
        %v1021 = vsel %vm653, %v1020, -1e+30
        %v1022 = vsel %vm599, %v1021, -inf
        %1023 = vmax.xlane.f32.xlu0 %v1022
        %v1024 = vpop.xlane.xlu0 %1023
        %v1025 = vsub.f32 %v1021, %v1024
        %v1026 = vmul.f32 %v1025, 1.442695
        %v1027 = vpow.pop %v1026
        %v1028 = vsel %vm599, %v1027, 0.0
        %1029 = vadd.xlane.f32.xlu0 %v1028
        %v1030 = vpop.xlane.xlu0 %1029
        %v1031 = vrcp.pop %v1030
        %v1032 = vmul.f32 %v1027, %v1031
        %v1033 = vpack.c.bf16 %v1032, %v1032
        %1034 = vrot.lane.b32.xlu0 %v613, 16
        %v1035 = vpop.permute.xlu0 %1034
        %v1037 = vsel %vm599, %v1033, 0
        %v1040 = vsel %vm751, %v1035, 0
        %1042 = vmatprep.subr.bf16.mxu0 0
        %1043 = vmatpush1.bf16.msra.mxu0 %v1040
        %1044 = vmatprep.subr.bf16.mxu0 0
        %1045 = vmatpush1.bf16.msra.mxu0 0
        %1046 = vmatprep.subr.bf16.mxu0 0
        %1047 = vmatpush1.bf16.msra.mxu0 0
        %1048 = vmatprep.subr.bf16.mxu0 0
        %1049 = vmatpush1.bf16.msra.mxu0 0
        %1050 = vmatprep.subr.bf16.mxu0 0
        %1051 = vmatpush1.bf16.msra.mxu0 0
        %1052 = vmatprep.subr.bf16.mxu0 0
        %1053 = vmatpush1.bf16.msra.mxu0 0
        %1054 = vmatprep.subr.bf16.mxu0 0
        %1055 = vmatpush1.bf16.msra.mxu0 0
        %1056 = vmatprep.subr.bf16.mxu0 0
        %1057 = vmatpush1.bf16.msra.mxu0 0
        %1058 = vmatprep.subr.bf16.mxu0 0
        %1059 = vmatpush1.bf16.msra.mxu0 0
        %1060 = vmatprep.subr.bf16.mxu0 0
        %1061 = vmatpush1.bf16.msra.mxu0 0
        %1062 = vmatprep.subr.bf16.mxu0 0
        %1063 = vmatpush1.bf16.msra.mxu0 0
        %1064 = vmatprep.subr.bf16.mxu0 0
        %1065 = vmatpush1.bf16.msra.mxu0 0
        %1066 = vmatprep.subr.bf16.mxu0 0
        %1067 = vmatpush1.bf16.msra.mxu0 0
        %1068 = vmatprep.subr.bf16.mxu0 0
        %1069 = vmatpush1.bf16.msra.mxu0 0
        %1070 = vmatprep.subr.bf16.mxu0 0
        %1071 = vmatpush1.bf16.msra.mxu0 0
        %1072 = vmatprep.subr.bf16.mxu0 0
        %1073 = vmatpush1.bf16.msra.mxu0 0
        %1074 = vmatprep.mubr.bf16.mxu0 0
        %1075 = vmatmul.mubr.bf16.gmra.mrb[0].mxu0 %v1037
        %v1076 = vpop.f32.mrb[0].mxu0
        %v1077 = vadd.f32 0.0, %v1076
        %v1078 = vpop.f32.mrb[0].mxu0
        %v1079 = vpop.f32.mrb[0].mxu0
        %v1080 = vpop.f32.mrb[0].mxu0
        %1081 = vdwg.mxu0
        %1082 = vrot.lane.b32.xlu0 %v567, 80
        %v1083 = vpop.permute.xlu0 %1082
        %v1085 = vsel %vm572, %v1083, 0.0
        %1086 = vadd.xlane.f32.xlu0 %v1085
        %v1087 = vpop.xlane.xlu0 %1086
        %v1088 = vmul.f32 %v1087, %v576
        %v1089 = vadd.f32 %v1088, 1e-06
        %v1090 = vrsqrt.pop %v1089
        %v1091 = vmul.f32 %v558, %v1090
        %1092 = vrot.lane.b32.xlu0 %v665, 48
        %v1093 = vpop.permute.xlu0 %1092
        %v1095 = vmul.f32 %v1091, %v1093
        %v1096 = vsub.f32 0.0, %v1095
        %1098 = vrot.lane.b32.xlu0 %v1096, 72
        %v1099 = vpop.permute.xlu0 %1098
        %1102 = vrot.lane.b32.xlu0 %v1095, 88
        %v1103 = vpop.permute.xlu0 %1102
        %v1105 = vsel %vm599, %v1099, %v1103
        %1106 = vrot.lane.b32.xlu0 %v563, 48
        %v1107 = vpop.permute.xlu0 %1106
        %v1109 = vmul.f32 %v1095, %v1107
        %v1110 = vmul.f32 %v1105, %v564
        %1112 = vrot.lane.b32.xlu0 %v1110, 48
        %v1113 = vpop.permute.xlu0 %1112
        %v1115 = vadd.f32 %v1109, %v1113
        %v1116 = vpack.c.bf16 %v1115, %v1115
        %1118 = vrot.lane.b32.xlu0 %v1116, 80
        %v1119 = vpop.permute.xlu0 %1118
        %v1121 = vsel %vm572, %v1119, 0
        %1123 = vmatprep.subr.bf16.mxu0 0
        %1124 = vmatpush1.bf16.xpose.msra.mxu0 %v978
        %1125 = vmatprep.subr.bf16.mxu0 0
        %1126 = vmatpush1.bf16.xpose.msra.mxu0 0
        %1127 = vmatprep.subr.bf16.mxu0 0
        %1128 = vmatpush1.bf16.xpose.msra.mxu0 0
        %1129 = vmatprep.subr.bf16.mxu0 0
        %1130 = vmatpush1.bf16.xpose.msra.mxu0 0
        %1131 = vmatprep.subr.bf16.mxu0 0
        %1132 = vmatpush1.bf16.xpose.msra.mxu0 0
        %1133 = vmatprep.subr.bf16.mxu0 0
        %1134 = vmatpush1.bf16.xpose.msra.mxu0 0
        %1135 = vmatprep.subr.bf16.mxu0 0
        %1136 = vmatpush1.bf16.xpose.msra.mxu0 0
        %1137 = vmatprep.subr.bf16.mxu0 0
        %1138 = vmatpush1.bf16.xpose.msra.mxu0 0
        %1139 = vmatprep.subr.bf16.mxu0 0
        %1140 = vmatpush1.bf16.xpose.msra.mxu0 0
        %1141 = vmatprep.subr.bf16.mxu0 0
        %1142 = vmatpush1.bf16.xpose.msra.mxu0 0
        %1143 = vmatprep.subr.bf16.mxu0 0
        %1144 = vmatpush1.bf16.xpose.msra.mxu0 0
        %1145 = vmatprep.subr.bf16.mxu0 0
        %1146 = vmatpush1.bf16.xpose.msra.mxu0 0
        %1147 = vmatprep.subr.bf16.mxu0 0
        %1148 = vmatpush1.bf16.xpose.msra.mxu0 0
        %1149 = vmatprep.subr.bf16.mxu0 0
        %1150 = vmatpush1.bf16.xpose.msra.mxu0 0
        %1151 = vmatprep.subr.bf16.mxu0 0
        %1152 = vmatpush1.bf16.xpose.msra.mxu0 0
        %1153 = vmatprep.subr.bf16.mxu0 0
        %1154 = vmatpush1.bf16.xpose.msra.mxu0 0
        %1155 = vmatprep.mubr.bf16.mxu0 0
        %1156 = vmatmul.mubr.bf16.gmra.mrb[0].mxu0 %v1121
        %v1157 = vpop.f32.mrb[0].mxu0
        %v1158 = vadd.f32 0.0, %v1157
        %v1159 = vpop.f32.mrb[0].mxu0
        %v1160 = vpop.f32.mrb[0].mxu0
        %v1161 = vpop.f32.mrb[0].mxu0
        %1162 = vdwg.mxu0
        %v1163 = vmul.f32 %v1158, 0.25
        %v1164 = vsel %vm653, %v1163, -1e+30
        %v1165 = vsel %vm599, %v1164, -inf
        %1166 = vmax.xlane.f32.xlu0 %v1165
        %v1167 = vpop.xlane.xlu0 %1166
        %v1168 = vsub.f32 %v1164, %v1167
        %v1169 = vmul.f32 %v1168, 1.442695
        %v1170 = vpow.pop %v1169
        %v1171 = vsel %vm599, %v1170, 0.0
        %1172 = vadd.xlane.f32.xlu0 %v1171
        %v1173 = vpop.xlane.xlu0 %1172
        %v1174 = vrcp.pop %v1173
        %v1175 = vmul.f32 %v1170, %v1174
        %v1176 = vpack.c.bf16 %v1175, %v1175
        %v1178 = vsel %vm599, %v1176, 0
        %1180 = vmatprep.subr.bf16.mxu0 0
        %1181 = vmatpush1.bf16.msra.mxu0 %v1040
        %1182 = vmatprep.subr.bf16.mxu0 0
        %1183 = vmatpush1.bf16.msra.mxu0 0
        %1184 = vmatprep.subr.bf16.mxu0 0
        %1185 = vmatpush1.bf16.msra.mxu0 0
        %1186 = vmatprep.subr.bf16.mxu0 0
        %1187 = vmatpush1.bf16.msra.mxu0 0
        %1188 = vmatprep.subr.bf16.mxu0 0
        %1189 = vmatpush1.bf16.msra.mxu0 0
        %1190 = vmatprep.subr.bf16.mxu0 0
        %1191 = vmatpush1.bf16.msra.mxu0 0
        %1192 = vmatprep.subr.bf16.mxu0 0
        %1193 = vmatpush1.bf16.msra.mxu0 0
        %1194 = vmatprep.subr.bf16.mxu0 0
        %1195 = vmatpush1.bf16.msra.mxu0 0
        %1196 = vmatprep.subr.bf16.mxu0 0
        %1197 = vmatpush1.bf16.msra.mxu0 0
        %1198 = vmatprep.subr.bf16.mxu0 0
        %1199 = vmatpush1.bf16.msra.mxu0 0
        %1200 = vmatprep.subr.bf16.mxu0 0
        %1201 = vmatpush1.bf16.msra.mxu0 0
        %1202 = vmatprep.subr.bf16.mxu0 0
        %1203 = vmatpush1.bf16.msra.mxu0 0
        %1204 = vmatprep.subr.bf16.mxu0 0
        %1205 = vmatpush1.bf16.msra.mxu0 0
        %1206 = vmatprep.subr.bf16.mxu0 0
        %1207 = vmatpush1.bf16.msra.mxu0 0
        %1208 = vmatprep.subr.bf16.mxu0 0
        %1209 = vmatpush1.bf16.msra.mxu0 0
        %1210 = vmatprep.subr.bf16.mxu0 0
        %1211 = vmatpush1.bf16.msra.mxu0 0
        %1212 = vmatprep.mubr.bf16.mxu0 0
        %1213 = vmatmul.mubr.bf16.gmra.mrb[0].mxu0 %v1178
        %v1214 = vpop.f32.mrb[0].mxu0
        %v1215 = vadd.f32 0.0, %v1214
        %v1216 = vpop.f32.mrb[0].mxu0
        %v1217 = vpop.f32.mrb[0].mxu0
        %v1218 = vpop.f32.mrb[0].mxu0
        %1219 = vdwg.mxu0
        %1221 = vrot.lane.b32.xlu0 %v928, 16
        %v1222 = vpop.permute.xlu0 %1221
        %1225 = vrot.lane.b32.xlu0 %v1077, 32
        %v1226 = vpop.permute.xlu0 %1225
        %1229 = vrot.lane.b32.xlu0 %v1215, 48
        %v1230 = vpop.permute.xlu0 %1229
        %v1232 = vsel %vm572, %v790, %v1222
        %vm1233 = vcmask 261120
        %v1234 = vsel %vm1233, %v1232, %v1226
        %vm1235 = vcmask 392192
        %v1236 = vsel %vm1235, %v1234, %v1230
        %v1237 = vpack.c.bf16 %v1236, %v1236
        %v1238 = vld [vmem:[#allocation10] sm:$0xf]
        %v1239 = vld [vmem:[#allocation10 + $0x4] sm:$0xf]
        %v1240 = vld [vmem:[#allocation10 + $0x8] sm:$0xf]
        %v1241 = vld [vmem:[#allocation10 + $0xc] sm:$0xf]
        %v1242 = vld [vmem:[#allocation10 + $0x10] sm:$0xf]
        %v1243 = vld [vmem:[#allocation10 + $0x14] sm:$0xf]
        %v1244 = vld [vmem:[#allocation10 + $0x18] sm:$0xf]
        %v1245 = vld [vmem:[#allocation10 + $0x1c] sm:$0xf]
        %v1254 = vunpack.c.l.b16 %v1238
        %v1255 = vunpack.c.l.b16 %v1239
        %v1256 = vunpack.c.l.b16 %v1240
        %v1257 = vunpack.c.l.b16 %v1241
        %v1258 = vunpack.c.l.b16 %v1242
        %v1259 = vunpack.c.l.b16 %v1243
        %v1260 = vunpack.c.l.b16 %v1244
        %v1261 = vunpack.c.l.b16 %v1245
        %v1262 = vpack.c.b16 %v1255, %v1254
        %v1263 = vpack.c.b16 %v1257, %v1256
        %v1264 = vpack.c.b16 %v1259, %v1258
        %v1265 = vpack.c.b16 %v1261, %v1260
        %v1271 = vsel %vm468, %v1237, 0
        %1273 = vmatprep.subr.bf16.mxu0 0
        %1274 = vmatpush1.bf16.msra.mxu0 %v1262
        %1275 = vmatprep.subr.bf16.mxu0 0
        %1276 = vmatpush1.bf16.msra.mxu0 %v1263
        %1277 = vmatprep.subr.bf16.mxu0 0
        %1278 = vmatpush1.bf16.msra.mxu0 %v1264
        %1279 = vmatprep.subr.bf16.mxu0 0
        %1280 = vmatpush1.bf16.msra.mxu0 %v1265
        %1281 = vmatprep.subr.bf16.mxu0 0
        %1282 = vmatpush1.bf16.msra.mxu0 0
        %1283 = vmatprep.subr.bf16.mxu0 0
        %1284 = vmatpush1.bf16.msra.mxu0 0
        %1285 = vmatprep.subr.bf16.mxu0 0
        %1286 = vmatpush1.bf16.msra.mxu0 0
        %1287 = vmatprep.subr.bf16.mxu0 0
        %1288 = vmatpush1.bf16.msra.mxu0 0
        %1289 = vmatprep.subr.bf16.mxu0 0
        %1290 = vmatpush1.bf16.msra.mxu0 0
        %1291 = vmatprep.subr.bf16.mxu0 0
        %1292 = vmatpush1.bf16.msra.mxu0 0
        %1293 = vmatprep.subr.bf16.mxu0 0
        %1294 = vmatpush1.bf16.msra.mxu0 0
        %1295 = vmatprep.subr.bf16.mxu0 0
        %1296 = vmatpush1.bf16.msra.mxu0 0
        %1297 = vmatprep.subr.bf16.mxu0 0
        %1298 = vmatpush1.bf16.msra.mxu0 0
        %1299 = vmatprep.subr.bf16.mxu0 0
        %1300 = vmatpush1.bf16.msra.mxu0 0
        %1301 = vmatprep.subr.bf16.mxu0 0
        %1302 = vmatpush1.bf16.msra.mxu0 0
        %1303 = vmatprep.subr.bf16.mxu0 0
        %1304 = vmatpush1.bf16.msra.mxu0 0
        %1305 = vmatprep.mubr.bf16.mxu0 0
        %1306 = vmatmul.mubr.bf16.gmra.mrb[0].mxu0 %v1271
        %v1307 = vpop.f32.mrb[0].mxu0
        %v1308 = vadd.f32 0.0, %v1307
        %v1309 = vpop.f32.mrb[0].mxu0
        %v1310 = vpop.f32.mrb[0].mxu0
        %v1311 = vpop.f32.mrb[0].mxu0
        %1312 = vdwg.mxu0
        %v1313 = vmul.f32 %v1308, 0.98994946
        %1314 = vst.msk [vmem:[%s456] sm:$0xff] %vm468, %v1313
        %s1315 = sand.u32 %s242, 1
        %s1316 = scalar_lea.sflag [#allocation4], %s1315
        %s1317 = sand.u32 %s242, 1
        %s1318 = smul.addr %s1317, 8
        %s1319 = scalar_lea.vmem [#allocation11], %s1318
        %s1320 = sand.u32 %s268, 1
        %s1321 = scalar_lea.sflag [#allocation13], %s1320
        %s1322 = sand.u32 %s268, 1
        %s1323 = smul.addr %s1322, 8
        %s1324 = scalar_lea.vmem [#allocation12], %s1323
        // Predicated region
        $region77: #{tpu_custom_call.1} parent=55 // pred_check
          %p1325 = pneg %p252
        $region78: #{tpu_custom_call.1} parent=55 // pred_check_branch
          %1327 = sbr.rel (%p1325) target = $region80
        $region79: #{tpu_custom_call.1} parent=55 // pred_region
          %s1329 = ssub.s32 128, 128
          %1330 = vsyncadd %s1316, %s1329
          %s1331 = smul.addr %s35, 128
          %s1332 = scalar_lea.hbm %s9, %s1331
          %s1334 = sshll.u32 %s1319, 4
          %s1335 = int_to_ptr.vmem [resolvable:$true] %s1334
          %1337 = dma.vmem_to_hbm [thread:$0]  %s1335, 128, %s1332, %s1316
        $region80: #{tpu_custom_call.1} parent=55 // pred_fallthru
          _
        // Predicated region
        $region81: #{tpu_custom_call.1} parent=55 // pred_check
          %p1338 = pneg %p278
        $region82: #{tpu_custom_call.1} parent=55 // pred_check_branch
          %1340 = sbr.rel (%p1338) target = $region84
        $region83: #{tpu_custom_call.1} parent=55 // pred_region
          %s1342 = ssub.s32 128, 128
          %1343 = vsyncadd %s1321, %s1342
          %s1344 = smul.addr %s35, 128
          %s1345 = scalar_lea.hbm %s10, %s1344
          %s1347 = sshll.u32 %s1324, 4
          %s1348 = int_to_ptr.vmem [resolvable:$true] %s1347
          %1350 = dma.vmem_to_hbm [thread:$0]  %s1348, 128, %s1345, %s1321
        $region84: #{tpu_custom_call.1} parent=55 // pred_fallthru
          _
      $region56: #{tpu_custom_call.1} parent=5 // pred_fallthru
        _
      %p1351 = scmp.le.s32.totalorder 2, %s30
      // Predicated region
      $region85: #{tpu_custom_call.1} parent=5 // pred_check
        %p1352 = pneg %p1351
      $region86: #{tpu_custom_call.1} parent=5 // pred_check_branch
        %1354 = sbr.rel (%p1352) target = $region88
      $region87: #{tpu_custom_call.1} parent=5 // pred_region
        %s1355 = ssub.s32 %s30, 2
        // Predicated region
        $region89: #{tpu_custom_call.1} parent=87 // pred_check
          %p1356 = pneg %p258
        $region90: #{tpu_custom_call.1} parent=87 // pred_check_branch
          %1358 = sbr.rel (%p1356) target = $region92
        $region91: #{tpu_custom_call.1} parent=87 // pred_region
          %s1359 = sand.u32 %s243, 1
          %s1360 = scalar_lea.sflag [#allocation4], %s1359
          %s1361 = sand.u32 %s243, 1
          %s1362 = smul.addr %s1361, 8
          %s1363 = scalar_lea.vmem [#allocation11], %s1362
          %1364 = dma.done %s1360, 128
        $region92: #{tpu_custom_call.1} parent=87 // pred_fallthru
          _
        // Predicated region
        $region93: #{tpu_custom_call.1} parent=87 // pred_check
          %p1365 = pneg %p284
        $region94: #{tpu_custom_call.1} parent=87 // pred_check_branch
          %1367 = sbr.rel (%p1365) target = $region96
        $region95: #{tpu_custom_call.1} parent=87 // pred_region
          %s1368 = sand.u32 %s269, 1
          %s1369 = scalar_lea.sflag [#allocation13], %s1368
          %s1370 = sand.u32 %s269, 1
          %s1371 = smul.addr %s1370, 8
          %s1372 = scalar_lea.vmem [#allocation12], %s1371
          %1373 = dma.done %s1369, 128
        $region96: #{tpu_custom_call.1} parent=87 // pred_fallthru
          _
      $region88: #{tpu_custom_call.1} parent=5 // pred_fallthru
        _
    $region6: #{tpu_custom_call.1} parent=1 // loop_footer
      %s34 = sadd.s32 1, %s30
    $region7: #{tpu_custom_call.1} parent=1 // loop_footer_branch
      %29 = sbr.rel target = $region3
    $region8: #{tpu_custom_call.1} parent=1 // loop_exit
      _
    %1374 = vsyncpa [#allocation3], 1
    %s1375 = scalar_lea.sflag [#allocation3], 1
    %1376 = vsyncpa %s1375, 1
    %1377 = vsyncpa [#allocation6], 1
    %s1378 = scalar_lea.sflag [#allocation6], 1
    %1379 = vsyncpa %s1378, 1
    %1380 = vsyncpa [#allocation9], 1
    %1381 = vsyncpa [#allocation4], 1
    %s1382 = scalar_lea.sflag [#allocation4], 1
    %1383 = vsyncpa %s1382, 1
    %1384 = vsyncpa [#allocation13], 1
    %s1385 = scalar_lea.sflag [#allocation13], 1
    %1386 = vsyncpa %s1385, 1

</llo_original>
